<compile_context>
chip_gen: v7x
topology: tpu7x:2x2x1
jax: 0.10.0
libtpu: 0.0.40
codegen_flags: <defaults>
</compile_context>

<pallas_src>
import jax
import jax.numpy as jnp
import numpy as np
from jax.experimental import pallas as pl
from jax.experimental.pallas import tpu as pltpu

# ---- module config (matches the PyTorch TextCNN at small/test size) ----
VOCAB_SIZE = 50
EMBEDDING_DIM = 32
SEQ_LEN = 16
NUM_FILTERS = 16
FILTER_SIZES = (2, 3, 4)
NUM_CLASSES = 4
BATCH = 2
DROPOUT_PROB = 0.5          # forward is evaluated in inference mode -> dropout == identity

KMAX = max(FILTER_SIZES)
VOCAB_PAD = 128                                   # lane-dense one-hot block per tap
TABLE_ROWS = KMAX * VOCAB_PAD                     # 512 : folded-table contraction depth
F_TOTAL = NUM_FILTERS * len(FILTER_SIZES)         # 48 real conv channels
F_PAD = 128                                       # conv-out / fc-in lanes (zero padded)
NC_PAD = 128                                      # fc-out lanes (lane-dense store)
BATCH_PAD = max(8, ((BATCH + 7) // 8) * 8)        # full-sublane pooled / output blocks
BL_PAD = BATCH_PAD * SEQ_LEN                      # 128 matmul rows

# max-over-time of a masked ReLU output is only valid if every width has >=1 valid pos
assert all(1 <= k <= SEQ_LEN for k in FILTER_SIZES), "filter size must be <= SEQ_LEN"
assert max(FILTER_SIZES) == KMAX and VOCAB_SIZE <= VOCAB_PAD


def _textcnn_kernel(ids_ref, table_ref, bconv_ref, mask_ref, fcw_ref, fcb_ref, out_ref):
    # --- shifted one-hot over all KMAX tap blocks -----------------------------------
    # ids_ref: [KMAX, BL_PAD, 1] int32; value = token_id + dk*VOCAB_PAD, or -1 if the
    # tap falls past the end of its sequence (so it can never match the iota).
    iota_c = jax.lax.broadcasted_iota(jnp.int32, (BL_PAD, TABLE_ROWS), 1)
    hit = iota_c == ids_ref[0]                          # [BL_PAD, 512] bool
    for dk in range(1, KMAX):
        hit = jnp.logical_or(hit, iota_c == ids_ref[dk])
    one_hot = hit.astype(jnp.bfloat16)                  # exact 0/1 values

    # --- embedding + im2col + all filter widths/taps in ONE K=512 bf16 matmul --------
    acc = jnp.dot(one_hot, table_ref[...],
                  preferred_element_type=jnp.float32)   # [BL_PAD, F_PAD] f32
    acc = jnp.maximum(acc + bconv_ref[...], 0.0)        # bias + ReLU (f32 VPU)

    # --- mask invalid time positions per filter width, max-over-time -----------------
    # Channels are filter-major, so torch.cat is implicit.
    acc = acc.reshape(BATCH_PAD, SEQ_LEN, F_PAD) * mask_ref[...][None]
    pooled = jnp.max(acc, axis=1)                       # [BATCH_PAD, F_PAD] f32

    # TODO(synk): training-mode dropout (pltpu PRNG + 1/(1-p) scaling) not implemented;
    # eval-mode dropout is the identity, matching the reference forward in eval.

    # --- classifier; [8, 128] output block -> unmasked, lane-dense store --------------
    logits = jnp.dot(pooled.astype(jnp.bfloat16), fcw_ref[...],
                     preferred_element_type=jnp.float32) + fcb_ref[...]
    out_ref[...] = logits


def _build_ids_cmp(token_ids):
    """[B, L] int tokens -> [KMAX, BATCH_PAD*L, 1] shifted + tap-offset comparand."""
    ids = jnp.zeros((BATCH_PAD, SEQ_LEN), jnp.int32)
    ids = ids.at[:BATCH, :].set(token_ids.astype(jnp.int32))
    cols = []
    for dk in range(KMAX):
        col = jnp.full((BATCH_PAD, SEQ_LEN), -1, jnp.int32)        # -1 => never matches
        col = col.at[:, : SEQ_LEN - dk].set(ids[:, dk:] + dk * VOCAB_PAD)
        cols.append(col.reshape(BL_PAD, 1))
    return jnp.stack(cols, axis=0)                                  # [KMAX, BL_PAD, 1]


@jax.jit
def textcnn_forward(token_ids, params):
    """token_ids: int [B, L].  Returns logits [B, NUM_CLASSES] float32."""
    ids_cmp = _build_ids_cmp(token_ids)
    vmem = pl.BlockSpec(memory_space=pltpu.MemorySpace.VMEM)
    # TODO(synk): at realistic batch sizes, grid over batch with
    # dimension_semantics=("parallel",) so v7x's two TensorCores split it, give the
    # table/fc operands constant index_maps so they stay VMEM-resident across the grid,
    # and budget tiles (x2 double-buffering) against v7x's 64 MiB VMEM via
    # vmem_limit_bytes.  Here every operand is <= 256 KiB, so a single gridless VMEM
    # block is the fastest configuration.
    out = pl.pallas_call(
        _textcnn_kernel,
        out_shape=jax.ShapeDtypeStruct((BATCH_PAD, NC_PAD), jnp.float32),
        in_specs=[vmem] * 6,
        out_specs=vmem,
    )(ids_cmp, params["conv_table"], params["conv_b"], params["time_mask"],
      params["fc_w_bf16"], params["fc_b"])
    return out[:BATCH, :NUM_CLASSES]


def init_params(key):
    """PyTorch-equivalent init, packed directly into the folded kernel layout."""
    keys = jax.random.split(key, 1 + 2 * len(FILTER_SIZES) + 2)

    # nn.Embedding default init ~ N(0,1); rows >= VOCAB_SIZE are zero padding.
    emb = jnp.zeros((VOCAB_PAD, EMBEDDING_DIM), jnp.float32)
    emb = emb.at[:VOCAB_SIZE].set(
        jax.random.normal(keys[0], (VOCAB_SIZE, EMBEDDING_DIM), jnp.float32))

    # Combined conv weight [KMAX*E, F_PAD] (tap-major rows, filter-major cols) + bias.
    conv_w = jnp.zeros((KMAX * EMBEDDING_DIM, F_PAD), jnp.float32)
    conv_b = jnp.zeros((1, F_PAD), jnp.float32)
    mask = np.zeros((SEQ_LEN, F_PAD), np.float32)
    for i, k in enumerate(FILTER_SIZES):
        fan_in = EMBEDDING_DIM * k
        bound = 1.0 / (fan_in ** 0.5)
        # PyTorch Conv1d weight [F, E, k] stored as [k, E, F] (tap, in, out).
        w_i = jax.random.uniform(keys[1 + 2 * i], (k, EMBEDDING_DIM, NUM_FILTERS),
                                 jnp.float32, -bound, bound)
        b_i = jax.random.uniform(keys[2 + 2 * i], (NUM_FILTERS,),
                                 jnp.float32, -bound, bound)
        conv_w = conv_w.at[:k * EMBEDDING_DIM,
                           i * NUM_FILTERS:(i + 1) * NUM_FILTERS].set(
            w_i.reshape(k * EMBEDDING_DIM, NUM_FILTERS))
        conv_b = conv_b.at[0, i * NUM_FILTERS:(i + 1) * NUM_FILTERS].set(b_i)
        mask[:SEQ_LEN - k + 1, i * NUM_FILTERS:(i + 1) * NUM_FILTERS] = 1.0

    # Folded per-tap table: T[dk*VOCAB_PAD + v, f] = emb[v, :] . W[tap=dk, :, f].
    table = jnp.zeros((TABLE_ROWS, F_PAD), jnp.float32)
    for dk in range(KMAX):
        t_dk = emb @ conv_w[dk * EMBEDDING_DIM:(dk + 1) * EMBEDDING_DIM, :]
        table = table.at[dk * VOCAB_PAD:(dk + 1) * VOCAB_PAD, :].set(t_dk)

    # Linear: PyTorch weight [C, 3F] stored transposed into the [F_PAD, NC_PAD] pad.
    bound = 1.0 / (F_TOTAL ** 0.5)
    fc_w = jnp.zeros((F_PAD, NC_PAD), jnp.float32)
    fc_w = fc_w.at[:F_TOTAL, :NUM_CLASSES].set(
        jax.random.uniform(keys[-2], (F_TOTAL, NUM_CLASSES), jnp.float32, -bound, bound))
    fc_b = jnp.zeros((1, NC_PAD), jnp.float32)
    fc_b = fc_b.at[0, :NUM_CLASSES].set(
        jax.random.uniform(keys[-1], (NUM_CLASSES,), jnp.float32, -bound, bound))

    return {
        # kernel operands: bf16 MXU weights, f32 elementwise operands
        "conv_table": table.astype(jnp.bfloat16),
        "conv_b": conv_b,
        "time_mask": jnp.asarray(mask),
        "fc_w_bf16": fc_w.astype(jnp.bfloat16),
        "fc_b": fc_b,
        # f32 originals kept for the plain-JAX reference
        "emb_table": emb,
        "conv_w": conv_w,
        "fc_w": fc_w,
    }


def _reference_forward(token_ids, params):
    """Plain-JAX f32 reference matching the PyTorch eval-mode forward."""
    emb = params["emb_table"][token_ids]                               # [B, L, E]
    pooled = []
    for i, k in enumerate(FILTER_SIZES):
        w = params["conv_w"][:k * EMBEDDING_DIM,
                             i * NUM_FILTERS:(i + 1) * NUM_FILTERS]
        w = w.reshape(k, EMBEDDING_DIM, NUM_FILTERS)                   # [k, E, F]
        b = params["conv_b"][0, i * NUM_FILTERS:(i + 1) * NUM_FILTERS]
        l_out = SEQ_LEN - k + 1
        conv = sum(jnp.einsum("ble,ef->blf", emb[:, dk:dk + l_out, :], w[dk])
                   for dk in range(k)) + b
        pooled.append(jnp.max(jax.nn.relu(conv), axis=1))
    cat = jnp.concatenate(pooled, axis=1)                              # [B, 3F]
    return cat @ params["fc_w"][:F_TOTAL, :NUM_CLASSES] + params["fc_b"][0, :NUM_CLASSES]


if __name__ == "__main__":
    key = jax.random.PRNGKey(0)
    pkey, xkey = jax.random.split(key)
    params = init_params(pkey)
    x = jax.random.randint(xkey, (BATCH, SEQ_LEN), 0, VOCAB_SIZE, dtype=jnp.int32)

    logits = textcnn_forward(x, params)
    jax.block_until_ready(logits)
    assert logits.shape == (BATCH, NUM_CLASSES)
    assert logits.dtype == jnp.float32

    ref = _reference_forward(x, params)
    # Tolerance covers bf16 rounding of the folded conv table / fc weights (f32 accumulate).
    np.testing.assert_allclose(np.asarray(logits), np.asarray(ref), rtol=3e-2, atol=3e-2)

    print("KERNEL_OK")
</pallas_src>

<mosaic_0001>
module attributes {stable_mosaic.version = 11 : i64} {
  func.func @_textcnn_kernel(%arg0: memref<4x128x1xi32, #tpu.memory_space<vmem>>, %arg1: memref<512x128xbf16, #tpu.memory_space<vmem>>, %arg2: memref<1x128xf32, #tpu.memory_space<vmem>>, %arg3: memref<16x128xf32, #tpu.memory_space<vmem>>, %arg4: memref<128x128xbf16, #tpu.memory_space<vmem>>, %arg5: memref<1x128xf32, #tpu.memory_space<vmem>>, %arg6: memref<8x128xf32, #tpu.memory_space<vmem>>) attributes {dimension_semantics = [], scalar_prefetch = 0 : i64, scratch_operands = 0 : i64, tpu.core_type = #tpu.core_type<tc>} {
    %0 = tpu.iota {dimensions = array<i32: 1>} : vector<128x512xi32>
    %c0 = arith.constant 0 : index
    %c0_0 = arith.constant 0 : index
    %c0_1 = arith.constant 0 : index
    %1 = vector.load %arg0[%c0, %c0_0, %c0_1] : memref<4x128x1xi32, #tpu.memory_space<vmem>>, vector<1x128x1xi32>
    %2 = vector.shape_cast %1 : vector<1x128x1xi32> to vector<128x1xi32>
    %3 = vector.broadcast %2 : vector<128x1xi32> to vector<128x512xi32>
    %4 = arith.cmpi eq, %0, %3 : vector<128x512xi32>
    %c1 = arith.constant 1 : index
    %c0_2 = arith.constant 0 : index
    %c0_3 = arith.constant 0 : index
    %5 = vector.load %arg0[%c1, %c0_2, %c0_3] : memref<4x128x1xi32, #tpu.memory_space<vmem>>, vector<1x128x1xi32>
    %6 = vector.shape_cast %5 : vector<1x128x1xi32> to vector<128x1xi32>
    %7 = vector.broadcast %6 : vector<128x1xi32> to vector<128x512xi32>
    %8 = arith.cmpi eq, %0, %7 : vector<128x512xi32>
    %9 = arith.ori %4, %8 : vector<128x512xi1>
    %c2 = arith.constant 2 : index
    %c0_4 = arith.constant 0 : index
    %c0_5 = arith.constant 0 : index
    %10 = vector.load %arg0[%c2, %c0_4, %c0_5] : memref<4x128x1xi32, #tpu.memory_space<vmem>>, vector<1x128x1xi32>
    %11 = vector.shape_cast %10 : vector<1x128x1xi32> to vector<128x1xi32>
    %12 = vector.broadcast %11 : vector<128x1xi32> to vector<128x512xi32>
    %13 = arith.cmpi eq, %0, %12 : vector<128x512xi32>
    %14 = arith.ori %9, %13 : vector<128x512xi1>
    %c3 = arith.constant 3 : index
    %c0_6 = arith.constant 0 : index
    %c0_7 = arith.constant 0 : index
    %15 = vector.load %arg0[%c3, %c0_6, %c0_7] : memref<4x128x1xi32, #tpu.memory_space<vmem>>, vector<1x128x1xi32>
    %16 = vector.shape_cast %15 : vector<1x128x1xi32> to vector<128x1xi32>
    %17 = vector.broadcast %16 : vector<128x1xi32> to vector<128x512xi32>
    %18 = arith.cmpi eq, %0, %17 : vector<128x512xi32>
    %19 = arith.ori %14, %18 : vector<128x512xi1>
    %20 = arith.extui %19 : vector<128x512xi1> to vector<128x512xi32>
    %21 = arith.sitofp %20 : vector<128x512xi32> to vector<128x512xf32>
    %22 = arith.truncf %21 : vector<128x512xf32> to vector<128x512xbf16>
    %c0_8 = arith.constant 0 : index
    %c0_9 = arith.constant 0 : index
    %23 = vector.load %arg1[%c0_8, %c0_9] : memref<512x128xbf16, #tpu.memory_space<vmem>>, vector<512x128xbf16>
    %cst = arith.constant dense<0.000000e+00> : vector<128x128xf32>
    %24 = tpu.matmul %22, %23, %cst {dimension_numbers = #tpu.dot_dimension_numbers<[1], [0], [0], [1], [0, 0, 1, 1], [], []>} : vector<128x512xbf16>, vector<512x128xbf16>, vector<128x128xf32> -> vector<128x128xf32>
    %c0_10 = arith.constant 0 : index
    %c0_11 = arith.constant 0 : index
    %25 = vector.load %arg2[%c0_10, %c0_11] : memref<1x128xf32, #tpu.memory_space<vmem>>, vector<1x128xf32>
    %26 = vector.broadcast %25 : vector<1x128xf32> to vector<128x128xf32>
    %27 = arith.addf %24, %26 : vector<128x128xf32>
    %cst_12 = arith.constant 0.000000e+00 : f32
    %28 = vector.broadcast %cst_12 : f32 to vector<128x128xf32>
    %29 = arith.maximumf %27, %28 : vector<128x128xf32>
    %30 = vector.shape_cast %29 : vector<128x128xf32> to vector<8x16x128xf32>
    %c0_13 = arith.constant 0 : index
    %c0_14 = arith.constant 0 : index
    %31 = vector.load %arg3[%c0_13, %c0_14] : memref<16x128xf32, #tpu.memory_space<vmem>>, vector<16x128xf32>
    %32 = vector.shape_cast %31 : vector<16x128xf32> to vector<1x16x128xf32>
    %33 = vector.broadcast %32 : vector<1x16x128xf32> to vector<8x16x128xf32>
    %34 = arith.mulf %30, %33 : vector<8x16x128xf32>
    %cst_15 = arith.constant dense<0xFF800000> : vector<8x128xf32>
    %35 = vector.multi_reduction <maximumf>, %34, %cst_15 [1] : vector<8x16x128xf32> to vector<8x128xf32>
    %36 = arith.truncf %35 : vector<8x128xf32> to vector<8x128xbf16>
    %c0_16 = arith.constant 0 : index
    %c0_17 = arith.constant 0 : index
    %37 = vector.load %arg4[%c0_16, %c0_17] : memref<128x128xbf16, #tpu.memory_space<vmem>>, vector<128x128xbf16>
    %cst_18 = arith.constant dense<0.000000e+00> : vector<8x128xf32>
    %38 = tpu.matmul %36, %37, %cst_18 {dimension_numbers = #tpu.dot_dimension_numbers<[1], [0], [0], [1], [0, 0, 1, 1], [], []>} : vector<8x128xbf16>, vector<128x128xbf16>, vector<8x128xf32> -> vector<8x128xf32>
    %c0_19 = arith.constant 0 : index
    %c0_20 = arith.constant 0 : index
    %39 = vector.load %arg5[%c0_19, %c0_20] : memref<1x128xf32, #tpu.memory_space<vmem>>, vector<1x128xf32>
    %40 = vector.broadcast %39 : vector<1x128xf32> to vector<8x128xf32>
    %41 = arith.addf %38, %40 : vector<8x128xf32>
    %c0_21 = arith.constant 0 : index
    %c0_22 = arith.constant 0 : index
    %42 = vector.load %arg6[%c0_21, %c0_22] : memref<8x128xf32, #tpu.memory_space<vmem>>, vector<8x128xf32>
    tpu.vector_store %arg6[%c0_21, %c0_22], %41 {strides = array<i32>} : memref<8x128xf32, #tpu.memory_space<vmem>>, vector<8x128xf32>,
    return
  }
}

</mosaic_0001>

<llo_original>
// kernel: textcnn_forward.1
$region0: #{textcnn_forward.1}
  #allocation0 [shape = 'u32[]', space=smem, size = 0x4, offset = 0x4, fixed_abs, tag = 'smem constant byte address 0x4 - core index']
  #allocation1 [shape = 'u32[144,128]{1,0:T(1,128)}', space=vmem, size = 0x12000, scoped, tag = 'internal scratch']
  %s0 = inlined_call_operand.vmem [shape: s32[4,128,1], index: 0, kind: input, shape index: {}]
  %s1 = inlined_call_operand.vmem [shape: bf16[512,128], index: 1, kind: input, shape index: {}]
  %s2 = inlined_call_operand.vmem [shape: f32[1,128], index: 2, kind: input, shape index: {}]
  %s3 = inlined_call_operand.vmem [shape: f32[16,128], index: 3, kind: input, shape index: {}]
  %s4 = inlined_call_operand.vmem [shape: bf16[128,128], index: 4, kind: input, shape index: {}]
  %s5 = inlined_call_operand.vmem [shape: f32[1,128], index: 5, kind: input, shape index: {}]
  %s6 = inlined_call_operand.vmem [shape: f32[8,128], index: 6, kind: output, shape index: {}]
  %s7 = sld [smem:[#allocation0]]
  $region34: #{textcnn_forward.1} parent=0
    _
  %s9 = ssub.s32 1, %s7
  %s10 = scalar_select 0, %s9, %s7
  // Predicated region
  $region2: #{textcnn_forward.1} parent=0 // pred_check
    _
  $region3: #{textcnn_forward.1} parent=0 // pred_check_branch
    %12 = sbr.rel (0) target = $region5
  $region4: #{textcnn_forward.1} parent=0 // pred_region
    _
  $region5: #{textcnn_forward.1} parent=0 // pred_fallthru
    _
  // Predicated region
  $region6: #{textcnn_forward.1} parent=0 // pred_check
    _
  $region7: #{textcnn_forward.1} parent=0 // pred_check_branch
    %14 = sbr.rel (0) target = $region9
  $region8: #{textcnn_forward.1} parent=0 // pred_region
    _
  $region9: #{textcnn_forward.1} parent=0 // pred_fallthru
    _
  // Predicated region
  $region10: #{textcnn_forward.1} parent=0 // pred_check
    _
  $region11: #{textcnn_forward.1} parent=0 // pred_check_branch
    %16 = sbr.rel (0) target = $region13
  $region12: #{textcnn_forward.1} parent=0 // pred_region
    _
  $region13: #{textcnn_forward.1} parent=0 // pred_fallthru
    _
  // Predicated region
  $region14: #{textcnn_forward.1} parent=0 // pred_check
    _
  $region15: #{textcnn_forward.1} parent=0 // pred_check_branch
    %18 = sbr.rel (0) target = $region17
  $region16: #{textcnn_forward.1} parent=0 // pred_region
    _
  $region17: #{textcnn_forward.1} parent=0 // pred_fallthru
    _
  // Predicated region
  $region18: #{textcnn_forward.1} parent=0 // pred_check
    _
  $region19: #{textcnn_forward.1} parent=0 // pred_check_branch
    %20 = sbr.rel (0) target = $region21
  $region20: #{textcnn_forward.1} parent=0 // pred_region
    _
  $region21: #{textcnn_forward.1} parent=0 // pred_fallthru
    _
  // Predicated region
  $region22: #{textcnn_forward.1} parent=0 // pred_check
    _
  $region23: #{textcnn_forward.1} parent=0 // pred_check_branch
    %22 = sbr.rel (0) target = $region25
  $region24: #{textcnn_forward.1} parent=0 // pred_region
    _
  $region25: #{textcnn_forward.1} parent=0 // pred_fallthru
    _
  %v24 = vlaneseq
  %v25 = vand.u32 %v24, 127
  %v26 = vadd.s32 %v25, 128
  %v27 = vadd.s32 %v25, 256
  %v28 = vadd.s32 %v25, 384
  %v29 = vld [vmem:[%s0] sm:$0xff]
  %v30 = vld [vmem:[%s0 + $0x8] sm:$0xff]
  %v31 = vld [vmem:[%s0 + $0x10] sm:$0xff]
  %v32 = vld [vmem:[%s0 + $0x18] sm:$0xff]
  %v33 = vld [vmem:[%s0 + $0x20] sm:$0xff]
  %v34 = vld [vmem:[%s0 + $0x28] sm:$0xff]
  %v35 = vld [vmem:[%s0 + $0x30] sm:$0xff]
  %v36 = vld [vmem:[%s0 + $0x38] sm:$0xff]
  %v37 = vld [vmem:[%s0 + $0x40] sm:$0xff]
  %v38 = vld [vmem:[%s0 + $0x48] sm:$0xff]
  %v39 = vld [vmem:[%s0 + $0x50] sm:$0xff]
  %v40 = vld [vmem:[%s0 + $0x58] sm:$0xff]
  %v41 = vld [vmem:[%s0 + $0x60] sm:$0xff]
  %v42 = vld [vmem:[%s0 + $0x68] sm:$0xff]
  %v43 = vld [vmem:[%s0 + $0x70] sm:$0xff]
  %v44 = vld [vmem:[%s0 + $0x78] sm:$0xff]
  %45 = vset.pattern.permute.xlu0 0
  %46 = vperm.xlu0 %45, %v29
  %v47 = vpop.permute.xlu0 %46
  %48 = vset.pattern.permute.xlu0 0
  %49 = vperm.xlu0 %48, %v30
  %v50 = vpop.permute.xlu0 %49
  %51 = vset.pattern.permute.xlu0 0
  %52 = vperm.xlu0 %51, %v31
  %v53 = vpop.permute.xlu0 %52
  %54 = vset.pattern.permute.xlu0 0
  %55 = vperm.xlu0 %54, %v32
  %v56 = vpop.permute.xlu0 %55
  %57 = vset.pattern.permute.xlu0 0
  %58 = vperm.xlu0 %57, %v33
  %v59 = vpop.permute.xlu0 %58
  %60 = vset.pattern.permute.xlu0 0
  %61 = vperm.xlu0 %60, %v34
  %v62 = vpop.permute.xlu0 %61
  %63 = vset.pattern.permute.xlu0 0
  %64 = vperm.xlu0 %63, %v35
  %v65 = vpop.permute.xlu0 %64
  %66 = vset.pattern.permute.xlu0 0
  %67 = vperm.xlu0 %66, %v36
  %v68 = vpop.permute.xlu0 %67
  %69 = vset.pattern.permute.xlu0 0
  %70 = vperm.xlu0 %69, %v37
  %v71 = vpop.permute.xlu0 %70
  %72 = vset.pattern.permute.xlu0 0
  %73 = vperm.xlu0 %72, %v38
  %v74 = vpop.permute.xlu0 %73
  %75 = vset.pattern.permute.xlu0 0
  %76 = vperm.xlu0 %75, %v39
  %v77 = vpop.permute.xlu0 %76
  %78 = vset.pattern.permute.xlu0 0
  %79 = vperm.xlu0 %78, %v40
  %v80 = vpop.permute.xlu0 %79
  %81 = vset.pattern.permute.xlu0 0
  %82 = vperm.xlu0 %81, %v41
  %v83 = vpop.permute.xlu0 %82
  %84 = vset.pattern.permute.xlu0 0
  %85 = vperm.xlu0 %84, %v42
  %v86 = vpop.permute.xlu0 %85
  %87 = vset.pattern.permute.xlu0 0
  %88 = vperm.xlu0 %87, %v43
  %v89 = vpop.permute.xlu0 %88
  %90 = vset.pattern.permute.xlu0 0
  %91 = vperm.xlu0 %90, %v44
  %v92 = vpop.permute.xlu0 %91
  %vm93 = vcmp.eq.s32.totalorder %v25, %v47
  %vm94 = vcmp.eq.s32.totalorder %v26, %v47
  %vm95 = vcmp.eq.s32.totalorder %v27, %v47
  %vm96 = vcmp.eq.s32.totalorder %v28, %v47
  %vm97 = vcmp.eq.s32.totalorder %v25, %v50
  %vm98 = vcmp.eq.s32.totalorder %v26, %v50
  %vm99 = vcmp.eq.s32.totalorder %v27, %v50
  %vm100 = vcmp.eq.s32.totalorder %v28, %v50
  %vm101 = vcmp.eq.s32.totalorder %v25, %v53
  %vm102 = vcmp.eq.s32.totalorder %v26, %v53
  %vm103 = vcmp.eq.s32.totalorder %v27, %v53
  %vm104 = vcmp.eq.s32.totalorder %v28, %v53
  %vm105 = vcmp.eq.s32.totalorder %v25, %v56
  %vm106 = vcmp.eq.s32.totalorder %v26, %v56
  %vm107 = vcmp.eq.s32.totalorder %v27, %v56
  %vm108 = vcmp.eq.s32.totalorder %v28, %v56
  %vm109 = vcmp.eq.s32.totalorder %v25, %v59
  %vm110 = vcmp.eq.s32.totalorder %v26, %v59
  %vm111 = vcmp.eq.s32.totalorder %v27, %v59
  %vm112 = vcmp.eq.s32.totalorder %v28, %v59
  %vm113 = vcmp.eq.s32.totalorder %v25, %v62
  %vm114 = vcmp.eq.s32.totalorder %v26, %v62
  %vm115 = vcmp.eq.s32.totalorder %v27, %v62
  %vm116 = vcmp.eq.s32.totalorder %v28, %v62
  %vm117 = vcmp.eq.s32.totalorder %v25, %v65
  %vm118 = vcmp.eq.s32.totalorder %v26, %v65
  %vm119 = vcmp.eq.s32.totalorder %v27, %v65
  %vm120 = vcmp.eq.s32.totalorder %v28, %v65
  %vm121 = vcmp.eq.s32.totalorder %v25, %v68
  %vm122 = vcmp.eq.s32.totalorder %v26, %v68
  %vm123 = vcmp.eq.s32.totalorder %v27, %v68
  %vm124 = vcmp.eq.s32.totalorder %v28, %v68
  %vm125 = vcmp.eq.s32.totalorder %v25, %v71
  %vm126 = vcmp.eq.s32.totalorder %v26, %v71
  %vm127 = vcmp.eq.s32.totalorder %v27, %v71
  %vm128 = vcmp.eq.s32.totalorder %v28, %v71
  %vm129 = vcmp.eq.s32.totalorder %v25, %v74
  %vm130 = vcmp.eq.s32.totalorder %v26, %v74
  %vm131 = vcmp.eq.s32.totalorder %v27, %v74
  %vm132 = vcmp.eq.s32.totalorder %v28, %v74
  %vm133 = vcmp.eq.s32.totalorder %v25, %v77
  %vm134 = vcmp.eq.s32.totalorder %v26, %v77
  %vm135 = vcmp.eq.s32.totalorder %v27, %v77
  %vm136 = vcmp.eq.s32.totalorder %v28, %v77
  %vm137 = vcmp.eq.s32.totalorder %v25, %v80
  %vm138 = vcmp.eq.s32.totalorder %v26, %v80
  %vm139 = vcmp.eq.s32.totalorder %v27, %v80
  %vm140 = vcmp.eq.s32.totalorder %v28, %v80
  %vm141 = vcmp.eq.s32.totalorder %v25, %v83
  %vm142 = vcmp.eq.s32.totalorder %v26, %v83
  %vm143 = vcmp.eq.s32.totalorder %v27, %v83
  %vm144 = vcmp.eq.s32.totalorder %v28, %v83
  %vm145 = vcmp.eq.s32.totalorder %v25, %v86
  %vm146 = vcmp.eq.s32.totalorder %v26, %v86
  %vm147 = vcmp.eq.s32.totalorder %v27, %v86
  %vm148 = vcmp.eq.s32.totalorder %v28, %v86
  %vm149 = vcmp.eq.s32.totalorder %v25, %v89
  %vm150 = vcmp.eq.s32.totalorder %v26, %v89
  %vm151 = vcmp.eq.s32.totalorder %v27, %v89
  %vm152 = vcmp.eq.s32.totalorder %v28, %v89
  %vm153 = vcmp.eq.s32.totalorder %v25, %v92
  %vm154 = vcmp.eq.s32.totalorder %v26, %v92
  %vm155 = vcmp.eq.s32.totalorder %v27, %v92
  %vm156 = vcmp.eq.s32.totalorder %v28, %v92
  %s157 = scalar_lea.vmem %s0, 128
  %v158 = vld [vmem:[%s157] sm:$0xff]
  %v159 = vld [vmem:[%s157 + $0x8] sm:$0xff]
  %v160 = vld [vmem:[%s157 + $0x10] sm:$0xff]
  %v161 = vld [vmem:[%s157 + $0x18] sm:$0xff]
  %v162 = vld [vmem:[%s157 + $0x20] sm:$0xff]
  %v163 = vld [vmem:[%s157 + $0x28] sm:$0xff]
  %v164 = vld [vmem:[%s157 + $0x30] sm:$0xff]
  %v165 = vld [vmem:[%s157 + $0x38] sm:$0xff]
  %v166 = vld [vmem:[%s157 + $0x40] sm:$0xff]
  %v167 = vld [vmem:[%s157 + $0x48] sm:$0xff]
  %v168 = vld [vmem:[%s157 + $0x50] sm:$0xff]
  %v169 = vld [vmem:[%s157 + $0x58] sm:$0xff]
  %v170 = vld [vmem:[%s157 + $0x60] sm:$0xff]
  %v171 = vld [vmem:[%s157 + $0x68] sm:$0xff]
  %v172 = vld [vmem:[%s157 + $0x70] sm:$0xff]
  %v173 = vld [vmem:[%s157 + $0x78] sm:$0xff]
  %174 = vset.pattern.permute.xlu0 0
  %175 = vperm.xlu0 %174, %v158
  %v176 = vpop.permute.xlu0 %175
  %177 = vset.pattern.permute.xlu0 0
  %178 = vperm.xlu0 %177, %v159
  %v179 = vpop.permute.xlu0 %178
  %180 = vset.pattern.permute.xlu0 0
  %181 = vperm.xlu0 %180, %v160
  %v182 = vpop.permute.xlu0 %181
  %183 = vset.pattern.permute.xlu0 0
  %184 = vperm.xlu0 %183, %v161
  %v185 = vpop.permute.xlu0 %184
  %186 = vset.pattern.permute.xlu0 0
  %187 = vperm.xlu0 %186, %v162
  %v188 = vpop.permute.xlu0 %187
  %189 = vset.pattern.permute.xlu0 0
  %190 = vperm.xlu0 %189, %v163
  %v191 = vpop.permute.xlu0 %190
  %192 = vset.pattern.permute.xlu0 0
  %193 = vperm.xlu0 %192, %v164
  %v194 = vpop.permute.xlu0 %193
  %195 = vset.pattern.permute.xlu0 0
  %196 = vperm.xlu0 %195, %v165
  %v197 = vpop.permute.xlu0 %196
  %198 = vset.pattern.permute.xlu0 0
  %199 = vperm.xlu0 %198, %v166
  %v200 = vpop.permute.xlu0 %199
  %201 = vset.pattern.permute.xlu0 0
  %202 = vperm.xlu0 %201, %v167
  %v203 = vpop.permute.xlu0 %202
  %204 = vset.pattern.permute.xlu0 0
  %205 = vperm.xlu0 %204, %v168
  %v206 = vpop.permute.xlu0 %205
  %207 = vset.pattern.permute.xlu0 0
  %208 = vperm.xlu0 %207, %v169
  %v209 = vpop.permute.xlu0 %208
  %210 = vset.pattern.permute.xlu0 0
  %211 = vperm.xlu0 %210, %v170
  %v212 = vpop.permute.xlu0 %211
  %213 = vset.pattern.permute.xlu0 0
  %214 = vperm.xlu0 %213, %v171
  %v215 = vpop.permute.xlu0 %214
  %216 = vset.pattern.permute.xlu0 0
  %217 = vperm.xlu0 %216, %v172
  %v218 = vpop.permute.xlu0 %217
  %219 = vset.pattern.permute.xlu0 0
  %220 = vperm.xlu0 %219, %v173
  %v221 = vpop.permute.xlu0 %220
  %vm222 = vcmp.eq.s32.totalorder %v25, %v176
  %vm223 = vcmp.eq.s32.totalorder %v26, %v176
  %vm224 = vcmp.eq.s32.totalorder %v27, %v176
  %vm225 = vcmp.eq.s32.totalorder %v28, %v176
  %vm226 = vcmp.eq.s32.totalorder %v25, %v179
  %vm227 = vcmp.eq.s32.totalorder %v26, %v179
  %vm228 = vcmp.eq.s32.totalorder %v27, %v179
  %vm229 = vcmp.eq.s32.totalorder %v28, %v179
  %vm230 = vcmp.eq.s32.totalorder %v25, %v182
  %vm231 = vcmp.eq.s32.totalorder %v26, %v182
  %vm232 = vcmp.eq.s32.totalorder %v27, %v182
  %vm233 = vcmp.eq.s32.totalorder %v28, %v182
  %vm234 = vcmp.eq.s32.totalorder %v25, %v185
  %vm235 = vcmp.eq.s32.totalorder %v26, %v185
  %vm236 = vcmp.eq.s32.totalorder %v27, %v185
  %vm237 = vcmp.eq.s32.totalorder %v28, %v185
  %vm238 = vcmp.eq.s32.totalorder %v25, %v188
  %vm239 = vcmp.eq.s32.totalorder %v26, %v188
  %vm240 = vcmp.eq.s32.totalorder %v27, %v188
  %vm241 = vcmp.eq.s32.totalorder %v28, %v188
  %vm242 = vcmp.eq.s32.totalorder %v25, %v191
  %vm243 = vcmp.eq.s32.totalorder %v26, %v191
  %vm244 = vcmp.eq.s32.totalorder %v27, %v191
  %vm245 = vcmp.eq.s32.totalorder %v28, %v191
  %vm246 = vcmp.eq.s32.totalorder %v25, %v194
  %vm247 = vcmp.eq.s32.totalorder %v26, %v194
  %vm248 = vcmp.eq.s32.totalorder %v27, %v194
  %vm249 = vcmp.eq.s32.totalorder %v28, %v194
  %vm250 = vcmp.eq.s32.totalorder %v25, %v197
  %vm251 = vcmp.eq.s32.totalorder %v26, %v197
  %vm252 = vcmp.eq.s32.totalorder %v27, %v197
  %vm253 = vcmp.eq.s32.totalorder %v28, %v197
  %vm254 = vcmp.eq.s32.totalorder %v25, %v200
  %vm255 = vcmp.eq.s32.totalorder %v26, %v200
  %vm256 = vcmp.eq.s32.totalorder %v27, %v200
  %vm257 = vcmp.eq.s32.totalorder %v28, %v200
  %vm258 = vcmp.eq.s32.totalorder %v25, %v203
  %vm259 = vcmp.eq.s32.totalorder %v26, %v203
  %vm260 = vcmp.eq.s32.totalorder %v27, %v203
  %vm261 = vcmp.eq.s32.totalorder %v28, %v203
  %vm262 = vcmp.eq.s32.totalorder %v25, %v206
  %vm263 = vcmp.eq.s32.totalorder %v26, %v206
  %vm264 = vcmp.eq.s32.totalorder %v27, %v206
  %vm265 = vcmp.eq.s32.totalorder %v28, %v206
  %vm266 = vcmp.eq.s32.totalorder %v25, %v209
  %vm267 = vcmp.eq.s32.totalorder %v26, %v209
  %vm268 = vcmp.eq.s32.totalorder %v27, %v209
  %vm269 = vcmp.eq.s32.totalorder %v28, %v209
  %vm270 = vcmp.eq.s32.totalorder %v25, %v212
  %vm271 = vcmp.eq.s32.totalorder %v26, %v212
  %vm272 = vcmp.eq.s32.totalorder %v27, %v212
  %vm273 = vcmp.eq.s32.totalorder %v28, %v212
  %vm274 = vcmp.eq.s32.totalorder %v25, %v215
  %vm275 = vcmp.eq.s32.totalorder %v26, %v215
  %vm276 = vcmp.eq.s32.totalorder %v27, %v215
  %vm277 = vcmp.eq.s32.totalorder %v28, %v215
  %vm278 = vcmp.eq.s32.totalorder %v25, %v218
  %vm279 = vcmp.eq.s32.totalorder %v26, %v218
  %vm280 = vcmp.eq.s32.totalorder %v27, %v218
  %vm281 = vcmp.eq.s32.totalorder %v28, %v218
  %vm282 = vcmp.eq.s32.totalorder %v25, %v221
  %vm283 = vcmp.eq.s32.totalorder %v26, %v221
  %vm284 = vcmp.eq.s32.totalorder %v27, %v221
  %vm285 = vcmp.eq.s32.totalorder %v28, %v221
  %vm286 = vmor %vm93, %vm222
  %vm287 = vmor %vm94, %vm223
  %vm288 = vmor %vm95, %vm224
  %vm289 = vmor %vm96, %vm225
  %vm290 = vmor %vm97, %vm226
  %vm291 = vmor %vm98, %vm227
  %vm292 = vmor %vm99, %vm228
  %vm293 = vmor %vm100, %vm229
  %vm294 = vmor %vm101, %vm230
  %vm295 = vmor %vm102, %vm231
  %vm296 = vmor %vm103, %vm232
  %vm297 = vmor %vm104, %vm233
  %vm298 = vmor %vm105, %vm234
  %vm299 = vmor %vm106, %vm235
  %vm300 = vmor %vm107, %vm236
  %vm301 = vmor %vm108, %vm237
  %vm302 = vmor %vm109, %vm238
  %vm303 = vmor %vm110, %vm239
  %vm304 = vmor %vm111, %vm240
  %vm305 = vmor %vm112, %vm241
  %vm306 = vmor %vm113, %vm242
  %vm307 = vmor %vm114, %vm243
  %vm308 = vmor %vm115, %vm244
  %vm309 = vmor %vm116, %vm245
  %vm310 = vmor %vm117, %vm246
  %vm311 = vmor %vm118, %vm247
  %vm312 = vmor %vm119, %vm248
  %vm313 = vmor %vm120, %vm249
  %vm314 = vmor %vm121, %vm250
  %vm315 = vmor %vm122, %vm251
  %vm316 = vmor %vm123, %vm252
  %vm317 = vmor %vm124, %vm253
  %vm318 = vmor %vm125, %vm254
  %vm319 = vmor %vm126, %vm255
  %vm320 = vmor %vm127, %vm256
  %vm321 = vmor %vm128, %vm257
  %vm322 = vmor %vm129, %vm258
  %vm323 = vmor %vm130, %vm259
  %vm324 = vmor %vm131, %vm260
  %vm325 = vmor %vm132, %vm261
  %vm326 = vmor %vm133, %vm262
  %vm327 = vmor %vm134, %vm263
  %vm328 = vmor %vm135, %vm264
  %vm329 = vmor %vm136, %vm265
  %vm330 = vmor %vm137, %vm266
  %vm331 = vmor %vm138, %vm267
  %vm332 = vmor %vm139, %vm268
  %vm333 = vmor %vm140, %vm269
  %vm334 = vmor %vm141, %vm270
  %vm335 = vmor %vm142, %vm271
  %vm336 = vmor %vm143, %vm272
  %vm337 = vmor %vm144, %vm273
  %vm338 = vmor %vm145, %vm274
  %vm339 = vmor %vm146, %vm275
  %vm340 = vmor %vm147, %vm276
  %vm341 = vmor %vm148, %vm277
  %vm342 = vmor %vm149, %vm278
  %vm343 = vmor %vm150, %vm279
  %vm344 = vmor %vm151, %vm280
  %vm345 = vmor %vm152, %vm281
  %vm346 = vmor %vm153, %vm282
  %vm347 = vmor %vm154, %vm283
  %vm348 = vmor %vm155, %vm284
  %vm349 = vmor %vm156, %vm285
  %s350 = scalar_lea.vmem %s0, 256
  %v351 = vld [vmem:[%s350] sm:$0xff]
  %v352 = vld [vmem:[%s350 + $0x8] sm:$0xff]
  %v353 = vld [vmem:[%s350 + $0x10] sm:$0xff]
  %v354 = vld [vmem:[%s350 + $0x18] sm:$0xff]
  %v355 = vld [vmem:[%s350 + $0x20] sm:$0xff]
  %v356 = vld [vmem:[%s350 + $0x28] sm:$0xff]
  %v357 = vld [vmem:[%s350 + $0x30] sm:$0xff]
  %v358 = vld [vmem:[%s350 + $0x38] sm:$0xff]
  %v359 = vld [vmem:[%s350 + $0x40] sm:$0xff]
  %v360 = vld [vmem:[%s350 + $0x48] sm:$0xff]
  %v361 = vld [vmem:[%s350 + $0x50] sm:$0xff]
  %v362 = vld [vmem:[%s350 + $0x58] sm:$0xff]
  %v363 = vld [vmem:[%s350 + $0x60] sm:$0xff]
  %v364 = vld [vmem:[%s350 + $0x68] sm:$0xff]
  %v365 = vld [vmem:[%s350 + $0x70] sm:$0xff]
  %v366 = vld [vmem:[%s350 + $0x78] sm:$0xff]
  %367 = vset.pattern.permute.xlu0 0
  %368 = vperm.xlu0 %367, %v351
  %v369 = vpop.permute.xlu0 %368
  %370 = vset.pattern.permute.xlu0 0
  %371 = vperm.xlu0 %370, %v352
  %v372 = vpop.permute.xlu0 %371
  %373 = vset.pattern.permute.xlu0 0
  %374 = vperm.xlu0 %373, %v353
  %v375 = vpop.permute.xlu0 %374
  %376 = vset.pattern.permute.xlu0 0
  %377 = vperm.xlu0 %376, %v354
  %v378 = vpop.permute.xlu0 %377
  %379 = vset.pattern.permute.xlu0 0
  %380 = vperm.xlu0 %379, %v355
  %v381 = vpop.permute.xlu0 %380
  %382 = vset.pattern.permute.xlu0 0
  %383 = vperm.xlu0 %382, %v356
  %v384 = vpop.permute.xlu0 %383
  %385 = vset.pattern.permute.xlu0 0
  %386 = vperm.xlu0 %385, %v357
  %v387 = vpop.permute.xlu0 %386
  %388 = vset.pattern.permute.xlu0 0
  %389 = vperm.xlu0 %388, %v358
  %v390 = vpop.permute.xlu0 %389
  %391 = vset.pattern.permute.xlu0 0
  %392 = vperm.xlu0 %391, %v359
  %v393 = vpop.permute.xlu0 %392
  %394 = vset.pattern.permute.xlu0 0
  %395 = vperm.xlu0 %394, %v360
  %v396 = vpop.permute.xlu0 %395
  %397 = vset.pattern.permute.xlu0 0
  %398 = vperm.xlu0 %397, %v361
  %v399 = vpop.permute.xlu0 %398
  %400 = vset.pattern.permute.xlu0 0
  %401 = vperm.xlu0 %400, %v362
  %v402 = vpop.permute.xlu0 %401
  %403 = vset.pattern.permute.xlu0 0
  %404 = vperm.xlu0 %403, %v363
  %v405 = vpop.permute.xlu0 %404
  %406 = vset.pattern.permute.xlu0 0
  %407 = vperm.xlu0 %406, %v364
  %v408 = vpop.permute.xlu0 %407
  %409 = vset.pattern.permute.xlu0 0
  %410 = vperm.xlu0 %409, %v365
  %v411 = vpop.permute.xlu0 %410
  %412 = vset.pattern.permute.xlu0 0
  %413 = vperm.xlu0 %412, %v366
  %v414 = vpop.permute.xlu0 %413
  %vm415 = vcmp.eq.s32.totalorder %v25, %v369
  %vm416 = vcmp.eq.s32.totalorder %v26, %v369
  %vm417 = vcmp.eq.s32.totalorder %v27, %v369
  %vm418 = vcmp.eq.s32.totalorder %v28, %v369
  %vm419 = vcmp.eq.s32.totalorder %v25, %v372
  %vm420 = vcmp.eq.s32.totalorder %v26, %v372
  %vm421 = vcmp.eq.s32.totalorder %v27, %v372
  %vm422 = vcmp.eq.s32.totalorder %v28, %v372
  %vm423 = vcmp.eq.s32.totalorder %v25, %v375
  %vm424 = vcmp.eq.s32.totalorder %v26, %v375
  %vm425 = vcmp.eq.s32.totalorder %v27, %v375
  %vm426 = vcmp.eq.s32.totalorder %v28, %v375
  %vm427 = vcmp.eq.s32.totalorder %v25, %v378
  %vm428 = vcmp.eq.s32.totalorder %v26, %v378
  %vm429 = vcmp.eq.s32.totalorder %v27, %v378
  %vm430 = vcmp.eq.s32.totalorder %v28, %v378
  %vm431 = vcmp.eq.s32.totalorder %v25, %v381
  %vm432 = vcmp.eq.s32.totalorder %v26, %v381
  %vm433 = vcmp.eq.s32.totalorder %v27, %v381
  %vm434 = vcmp.eq.s32.totalorder %v28, %v381
  %vm435 = vcmp.eq.s32.totalorder %v25, %v384
  %vm436 = vcmp.eq.s32.totalorder %v26, %v384
  %vm437 = vcmp.eq.s32.totalorder %v27, %v384
  %vm438 = vcmp.eq.s32.totalorder %v28, %v384
  %vm439 = vcmp.eq.s32.totalorder %v25, %v387
  %vm440 = vcmp.eq.s32.totalorder %v26, %v387
  %vm441 = vcmp.eq.s32.totalorder %v27, %v387
  %vm442 = vcmp.eq.s32.totalorder %v28, %v387
  %vm443 = vcmp.eq.s32.totalorder %v25, %v390
  %vm444 = vcmp.eq.s32.totalorder %v26, %v390
  %vm445 = vcmp.eq.s32.totalorder %v27, %v390
  %vm446 = vcmp.eq.s32.totalorder %v28, %v390
  %vm447 = vcmp.eq.s32.totalorder %v25, %v393
  %vm448 = vcmp.eq.s32.totalorder %v26, %v393
  %vm449 = vcmp.eq.s32.totalorder %v27, %v393
  %vm450 = vcmp.eq.s32.totalorder %v28, %v393
  %vm451 = vcmp.eq.s32.totalorder %v25, %v396
  %vm452 = vcmp.eq.s32.totalorder %v26, %v396
  %vm453 = vcmp.eq.s32.totalorder %v27, %v396
  %vm454 = vcmp.eq.s32.totalorder %v28, %v396
  %vm455 = vcmp.eq.s32.totalorder %v25, %v399
  %vm456 = vcmp.eq.s32.totalorder %v26, %v399
  %vm457 = vcmp.eq.s32.totalorder %v27, %v399
  %vm458 = vcmp.eq.s32.totalorder %v28, %v399
  %vm459 = vcmp.eq.s32.totalorder %v25, %v402
  %vm460 = vcmp.eq.s32.totalorder %v26, %v402
  %vm461 = vcmp.eq.s32.totalorder %v27, %v402
  %vm462 = vcmp.eq.s32.totalorder %v28, %v402
  %vm463 = vcmp.eq.s32.totalorder %v25, %v405
  %vm464 = vcmp.eq.s32.totalorder %v26, %v405
  %vm465 = vcmp.eq.s32.totalorder %v27, %v405
  %vm466 = vcmp.eq.s32.totalorder %v28, %v405
  %vm467 = vcmp.eq.s32.totalorder %v25, %v408
  %vm468 = vcmp.eq.s32.totalorder %v26, %v408
  %vm469 = vcmp.eq.s32.totalorder %v27, %v408
  %vm470 = vcmp.eq.s32.totalorder %v28, %v408
  %vm471 = vcmp.eq.s32.totalorder %v25, %v411
  %vm472 = vcmp.eq.s32.totalorder %v26, %v411
  %vm473 = vcmp.eq.s32.totalorder %v27, %v411
  %vm474 = vcmp.eq.s32.totalorder %v28, %v411
  %vm475 = vcmp.eq.s32.totalorder %v25, %v414
  %vm476 = vcmp.eq.s32.totalorder %v26, %v414
  %vm477 = vcmp.eq.s32.totalorder %v27, %v414
  %vm478 = vcmp.eq.s32.totalorder %v28, %v414
  %vm479 = vmor %vm286, %vm415
  %vm480 = vmor %vm287, %vm416
  %vm481 = vmor %vm288, %vm417
  %vm482 = vmor %vm289, %vm418
  %vm483 = vmor %vm290, %vm419
  %vm484 = vmor %vm291, %vm420
  %vm485 = vmor %vm292, %vm421
  %vm486 = vmor %vm293, %vm422
  %vm487 = vmor %vm294, %vm423
  %vm488 = vmor %vm295, %vm424
  %vm489 = vmor %vm296, %vm425
  %vm490 = vmor %vm297, %vm426
  %vm491 = vmor %vm298, %vm427
  %vm492 = vmor %vm299, %vm428
  %vm493 = vmor %vm300, %vm429
  %vm494 = vmor %vm301, %vm430
  %vm495 = vmor %vm302, %vm431
  %vm496 = vmor %vm303, %vm432
  %vm497 = vmor %vm304, %vm433
  %vm498 = vmor %vm305, %vm434
  %vm499 = vmor %vm306, %vm435
  %vm500 = vmor %vm307, %vm436
  %vm501 = vmor %vm308, %vm437
  %vm502 = vmor %vm309, %vm438
  %vm503 = vmor %vm310, %vm439
  %vm504 = vmor %vm311, %vm440
  %vm505 = vmor %vm312, %vm441
  %vm506 = vmor %vm313, %vm442
  %vm507 = vmor %vm314, %vm443
  %vm508 = vmor %vm315, %vm444
  %vm509 = vmor %vm316, %vm445
  %vm510 = vmor %vm317, %vm446
  %vm511 = vmor %vm318, %vm447
  %vm512 = vmor %vm319, %vm448
  %vm513 = vmor %vm320, %vm449
  %vm514 = vmor %vm321, %vm450
  %vm515 = vmor %vm322, %vm451
  %vm516 = vmor %vm323, %vm452
  %vm517 = vmor %vm324, %vm453
  %vm518 = vmor %vm325, %vm454
  %vm519 = vmor %vm326, %vm455
  %vm520 = vmor %vm327, %vm456
  %vm521 = vmor %vm328, %vm457
  %vm522 = vmor %vm329, %vm458
  %vm523 = vmor %vm330, %vm459
  %vm524 = vmor %vm331, %vm460
  %vm525 = vmor %vm332, %vm461
  %vm526 = vmor %vm333, %vm462
  %vm527 = vmor %vm334, %vm463
  %vm528 = vmor %vm335, %vm464
  %vm529 = vmor %vm336, %vm465
  %vm530 = vmor %vm337, %vm466
  %vm531 = vmor %vm338, %vm467
  %vm532 = vmor %vm339, %vm468
  %vm533 = vmor %vm340, %vm469
  %vm534 = vmor %vm341, %vm470
  %vm535 = vmor %vm342, %vm471
  %vm536 = vmor %vm343, %vm472
  %vm537 = vmor %vm344, %vm473
  %vm538 = vmor %vm345, %vm474
  %vm539 = vmor %vm346, %vm475
  %vm540 = vmor %vm347, %vm476
  %vm541 = vmor %vm348, %vm477
  %vm542 = vmor %vm349, %vm478
  %s543 = scalar_lea.vmem %s0, 384
  %v544 = vld [vmem:[%s543] sm:$0xff]
  %v545 = vld [vmem:[%s543 + $0x8] sm:$0xff]
  %v546 = vld [vmem:[%s543 + $0x10] sm:$0xff]
  %v547 = vld [vmem:[%s543 + $0x18] sm:$0xff]
  %v548 = vld [vmem:[%s543 + $0x20] sm:$0xff]
  %v549 = vld [vmem:[%s543 + $0x28] sm:$0xff]
  %v550 = vld [vmem:[%s543 + $0x30] sm:$0xff]
  %v551 = vld [vmem:[%s543 + $0x38] sm:$0xff]
  %v552 = vld [vmem:[%s543 + $0x40] sm:$0xff]
  %v553 = vld [vmem:[%s543 + $0x48] sm:$0xff]
  %v554 = vld [vmem:[%s543 + $0x50] sm:$0xff]
  %v555 = vld [vmem:[%s543 + $0x58] sm:$0xff]
  %v556 = vld [vmem:[%s543 + $0x60] sm:$0xff]
  %v557 = vld [vmem:[%s543 + $0x68] sm:$0xff]
  %v558 = vld [vmem:[%s543 + $0x70] sm:$0xff]
  %v559 = vld [vmem:[%s543 + $0x78] sm:$0xff]
  %560 = vset.pattern.permute.xlu0 0
  %561 = vperm.xlu0 %560, %v544
  %v562 = vpop.permute.xlu0 %561
  %563 = vset.pattern.permute.xlu0 0
  %564 = vperm.xlu0 %563, %v545
  %v565 = vpop.permute.xlu0 %564
  %566 = vset.pattern.permute.xlu0 0
  %567 = vperm.xlu0 %566, %v546
  %v568 = vpop.permute.xlu0 %567
  %569 = vset.pattern.permute.xlu0 0
  %570 = vperm.xlu0 %569, %v547
  %v571 = vpop.permute.xlu0 %570
  %572 = vset.pattern.permute.xlu0 0
  %573 = vperm.xlu0 %572, %v548
  %v574 = vpop.permute.xlu0 %573
  %575 = vset.pattern.permute.xlu0 0
  %576 = vperm.xlu0 %575, %v549
  %v577 = vpop.permute.xlu0 %576
  %578 = vset.pattern.permute.xlu0 0
  %579 = vperm.xlu0 %578, %v550
  %v580 = vpop.permute.xlu0 %579
  %581 = vset.pattern.permute.xlu0 0
  %582 = vperm.xlu0 %581, %v551
  %v583 = vpop.permute.xlu0 %582
  %584 = vset.pattern.permute.xlu0 0
  %585 = vperm.xlu0 %584, %v552
  %v586 = vpop.permute.xlu0 %585
  %587 = vset.pattern.permute.xlu0 0
  %588 = vperm.xlu0 %587, %v553
  %v589 = vpop.permute.xlu0 %588
  %590 = vset.pattern.permute.xlu0 0
  %591 = vperm.xlu0 %590, %v554
  %v592 = vpop.permute.xlu0 %591
  %593 = vset.pattern.permute.xlu0 0
  %594 = vperm.xlu0 %593, %v555
  %v595 = vpop.permute.xlu0 %594
  %596 = vset.pattern.permute.xlu0 0
  %597 = vperm.xlu0 %596, %v556
  %v598 = vpop.permute.xlu0 %597
  %599 = vset.pattern.permute.xlu0 0
  %600 = vperm.xlu0 %599, %v557
  %v601 = vpop.permute.xlu0 %600
  %602 = vset.pattern.permute.xlu0 0
  %603 = vperm.xlu0 %602, %v558
  %v604 = vpop.permute.xlu0 %603
  %605 = vset.pattern.permute.xlu0 0
  %606 = vperm.xlu0 %605, %v559
  %v607 = vpop.permute.xlu0 %606
  %vm608 = vcmp.eq.s32.totalorder %v25, %v562
  %vm609 = vcmp.eq.s32.totalorder %v26, %v562
  %vm610 = vcmp.eq.s32.totalorder %v27, %v562
  %vm611 = vcmp.eq.s32.totalorder %v28, %v562
  %vm612 = vcmp.eq.s32.totalorder %v25, %v565
  %vm613 = vcmp.eq.s32.totalorder %v26, %v565
  %vm614 = vcmp.eq.s32.totalorder %v27, %v565
  %vm615 = vcmp.eq.s32.totalorder %v28, %v565
  %vm616 = vcmp.eq.s32.totalorder %v25, %v568
  %vm617 = vcmp.eq.s32.totalorder %v26, %v568
  %vm618 = vcmp.eq.s32.totalorder %v27, %v568
  %vm619 = vcmp.eq.s32.totalorder %v28, %v568
  %vm620 = vcmp.eq.s32.totalorder %v25, %v571
  %vm621 = vcmp.eq.s32.totalorder %v26, %v571
  %vm622 = vcmp.eq.s32.totalorder %v27, %v571
  %vm623 = vcmp.eq.s32.totalorder %v28, %v571
  %vm624 = vcmp.eq.s32.totalorder %v25, %v574
  %vm625 = vcmp.eq.s32.totalorder %v26, %v574
  %vm626 = vcmp.eq.s32.totalorder %v27, %v574
  %vm627 = vcmp.eq.s32.totalorder %v28, %v574
  %vm628 = vcmp.eq.s32.totalorder %v25, %v577
  %vm629 = vcmp.eq.s32.totalorder %v26, %v577
  %vm630 = vcmp.eq.s32.totalorder %v27, %v577
  %vm631 = vcmp.eq.s32.totalorder %v28, %v577
  %vm632 = vcmp.eq.s32.totalorder %v25, %v580
  %vm633 = vcmp.eq.s32.totalorder %v26, %v580
  %vm634 = vcmp.eq.s32.totalorder %v27, %v580
  %vm635 = vcmp.eq.s32.totalorder %v28, %v580
  %vm636 = vcmp.eq.s32.totalorder %v25, %v583
  %vm637 = vcmp.eq.s32.totalorder %v26, %v583
  %vm638 = vcmp.eq.s32.totalorder %v27, %v583
  %vm639 = vcmp.eq.s32.totalorder %v28, %v583
  %vm640 = vcmp.eq.s32.totalorder %v25, %v586
  %vm641 = vcmp.eq.s32.totalorder %v26, %v586
  %vm642 = vcmp.eq.s32.totalorder %v27, %v586
  %vm643 = vcmp.eq.s32.totalorder %v28, %v586
  %vm644 = vcmp.eq.s32.totalorder %v25, %v589
  %vm645 = vcmp.eq.s32.totalorder %v26, %v589
  %vm646 = vcmp.eq.s32.totalorder %v27, %v589
  %vm647 = vcmp.eq.s32.totalorder %v28, %v589
  %vm648 = vcmp.eq.s32.totalorder %v25, %v592
  %vm649 = vcmp.eq.s32.totalorder %v26, %v592
  %vm650 = vcmp.eq.s32.totalorder %v27, %v592
  %vm651 = vcmp.eq.s32.totalorder %v28, %v592
  %vm652 = vcmp.eq.s32.totalorder %v25, %v595
  %vm653 = vcmp.eq.s32.totalorder %v26, %v595
  %vm654 = vcmp.eq.s32.totalorder %v27, %v595
  %vm655 = vcmp.eq.s32.totalorder %v28, %v595
  %vm656 = vcmp.eq.s32.totalorder %v25, %v598
  %vm657 = vcmp.eq.s32.totalorder %v26, %v598
  %vm658 = vcmp.eq.s32.totalorder %v27, %v598
  %vm659 = vcmp.eq.s32.totalorder %v28, %v598
  %vm660 = vcmp.eq.s32.totalorder %v25, %v601
  %vm661 = vcmp.eq.s32.totalorder %v26, %v601
  %vm662 = vcmp.eq.s32.totalorder %v27, %v601
  %vm663 = vcmp.eq.s32.totalorder %v28, %v601
  %vm664 = vcmp.eq.s32.totalorder %v25, %v604
  %vm665 = vcmp.eq.s32.totalorder %v26, %v604
  %vm666 = vcmp.eq.s32.totalorder %v27, %v604
  %vm667 = vcmp.eq.s32.totalorder %v28, %v604
  %vm668 = vcmp.eq.s32.totalorder %v25, %v607
  %vm669 = vcmp.eq.s32.totalorder %v26, %v607
  %vm670 = vcmp.eq.s32.totalorder %v27, %v607
  %vm671 = vcmp.eq.s32.totalorder %v28, %v607
  %vm672 = vmor %vm479, %vm608
  %vm673 = vmor %vm480, %vm609
  %vm674 = vmor %vm481, %vm610
  %vm675 = vmor %vm482, %vm611
  %vm676 = vmor %vm483, %vm612
  %vm677 = vmor %vm484, %vm613
  %vm678 = vmor %vm485, %vm614
  %vm679 = vmor %vm486, %vm615
  %vm680 = vmor %vm487, %vm616
  %vm681 = vmor %vm488, %vm617
  %vm682 = vmor %vm489, %vm618
  %vm683 = vmor %vm490, %vm619
  %vm684 = vmor %vm491, %vm620
  %vm685 = vmor %vm492, %vm621
  %vm686 = vmor %vm493, %vm622
  %vm687 = vmor %vm494, %vm623
  %vm688 = vmor %vm495, %vm624
  %vm689 = vmor %vm496, %vm625
  %vm690 = vmor %vm497, %vm626
  %vm691 = vmor %vm498, %vm627
  %vm692 = vmor %vm499, %vm628
  %vm693 = vmor %vm500, %vm629
  %vm694 = vmor %vm501, %vm630
  %vm695 = vmor %vm502, %vm631
  %vm696 = vmor %vm503, %vm632
  %vm697 = vmor %vm504, %vm633
  %vm698 = vmor %vm505, %vm634
  %vm699 = vmor %vm506, %vm635
  %vm700 = vmor %vm507, %vm636
  %vm701 = vmor %vm508, %vm637
  %vm702 = vmor %vm509, %vm638
  %vm703 = vmor %vm510, %vm639
  %vm704 = vmor %vm511, %vm640
  %vm705 = vmor %vm512, %vm641
  %vm706 = vmor %vm513, %vm642
  %vm707 = vmor %vm514, %vm643
  %vm708 = vmor %vm515, %vm644
  %vm709 = vmor %vm516, %vm645
  %vm710 = vmor %vm517, %vm646
  %vm711 = vmor %vm518, %vm647
  %vm712 = vmor %vm519, %vm648
  %vm713 = vmor %vm520, %vm649
  %vm714 = vmor %vm521, %vm650
  %vm715 = vmor %vm522, %vm651
  %vm716 = vmor %vm523, %vm652
  %vm717 = vmor %vm524, %vm653
  %vm718 = vmor %vm525, %vm654
  %vm719 = vmor %vm526, %vm655
  %vm720 = vmor %vm527, %vm656
  %vm721 = vmor %vm528, %vm657
  %vm722 = vmor %vm529, %vm658
  %vm723 = vmor %vm530, %vm659
  %vm724 = vmor %vm531, %vm660
  %vm725 = vmor %vm532, %vm661
  %vm726 = vmor %vm533, %vm662
  %vm727 = vmor %vm534, %vm663
  %vm728 = vmor %vm535, %vm664
  %vm729 = vmor %vm536, %vm665
  %vm730 = vmor %vm537, %vm666
  %vm731 = vmor %vm538, %vm667
  %vm732 = vmor %vm539, %vm668
  %vm733 = vmor %vm540, %vm669
  %vm734 = vmor %vm541, %vm670
  %vm735 = vmor %vm542, %vm671
  %v736 = vsel %vm672, 1, 0
  %v737 = vsel %vm673, 1, 0
  %v738 = vsel %vm674, 1, 0
  %v739 = vsel %vm675, 1, 0
  %v740 = vsel %vm676, 1, 0
  %v741 = vsel %vm677, 1, 0
  %v742 = vsel %vm678, 1, 0
  %v743 = vsel %vm679, 1, 0
  %v744 = vsel %vm680, 1, 0
  %v745 = vsel %vm681, 1, 0
  %v746 = vsel %vm682, 1, 0
  %v747 = vsel %vm683, 1, 0
  %v748 = vsel %vm684, 1, 0
  %v749 = vsel %vm685, 1, 0
  %v750 = vsel %vm686, 1, 0
  %v751 = vsel %vm687, 1, 0
  %v752 = vsel %vm688, 1, 0
  %v753 = vsel %vm689, 1, 0
  %v754 = vsel %vm690, 1, 0
  %v755 = vsel %vm691, 1, 0
  %v756 = vsel %vm692, 1, 0
  %v757 = vsel %vm693, 1, 0
  %v758 = vsel %vm694, 1, 0
  %v759 = vsel %vm695, 1, 0
  %v760 = vsel %vm696, 1, 0
  %v761 = vsel %vm697, 1, 0
  %v762 = vsel %vm698, 1, 0
  %v763 = vsel %vm699, 1, 0
  %v764 = vsel %vm700, 1, 0
  %v765 = vsel %vm701, 1, 0
  %v766 = vsel %vm702, 1, 0
  %v767 = vsel %vm703, 1, 0
  %v768 = vsel %vm704, 1, 0
  %v769 = vsel %vm705, 1, 0
  %v770 = vsel %vm706, 1, 0
  %v771 = vsel %vm707, 1, 0
  %v772 = vsel %vm708, 1, 0
  %v773 = vsel %vm709, 1, 0
  %v774 = vsel %vm710, 1, 0
  %v775 = vsel %vm711, 1, 0
  %v776 = vsel %vm712, 1, 0
  %v777 = vsel %vm713, 1, 0
  %v778 = vsel %vm714, 1, 0
  %v779 = vsel %vm715, 1, 0
  %v780 = vsel %vm716, 1, 0
  %v781 = vsel %vm717, 1, 0
  %v782 = vsel %vm718, 1, 0
  %v783 = vsel %vm719, 1, 0
  %v784 = vsel %vm720, 1, 0
  %v785 = vsel %vm721, 1, 0
  %v786 = vsel %vm722, 1, 0
  %v787 = vsel %vm723, 1, 0
  %v788 = vsel %vm724, 1, 0
  %v789 = vsel %vm725, 1, 0
  %v790 = vsel %vm726, 1, 0
  %v791 = vsel %vm727, 1, 0
  %v792 = vsel %vm728, 1, 0
  %v793 = vsel %vm729, 1, 0
  %v794 = vsel %vm730, 1, 0
  %v795 = vsel %vm731, 1, 0
  %v796 = vsel %vm732, 1, 0
  %v797 = vsel %vm733, 1, 0
  %v798 = vsel %vm734, 1, 0
  %v799 = vsel %vm735, 1, 0
  %v800 = vcvt.s32.f32 %v736
  %v801 = vcvt.s32.f32 %v737
  %v802 = vcvt.s32.f32 %v738
  %v803 = vcvt.s32.f32 %v739
  %v804 = vcvt.s32.f32 %v740
  %v805 = vcvt.s32.f32 %v741
  %v806 = vcvt.s32.f32 %v742
  %v807 = vcvt.s32.f32 %v743
  %v808 = vcvt.s32.f32 %v744
  %v809 = vcvt.s32.f32 %v745
  %v810 = vcvt.s32.f32 %v746
  %v811 = vcvt.s32.f32 %v747
  %v812 = vcvt.s32.f32 %v748
  %v813 = vcvt.s32.f32 %v749
  %v814 = vcvt.s32.f32 %v750
  %v815 = vcvt.s32.f32 %v751
  %v816 = vcvt.s32.f32 %v752
  %v817 = vcvt.s32.f32 %v753
  %v818 = vcvt.s32.f32 %v754
  %v819 = vcvt.s32.f32 %v755
  %v820 = vcvt.s32.f32 %v756
  %v821 = vcvt.s32.f32 %v757
  %v822 = vcvt.s32.f32 %v758
  %v823 = vcvt.s32.f32 %v759
  %v824 = vcvt.s32.f32 %v760
  %v825 = vcvt.s32.f32 %v761
  %v826 = vcvt.s32.f32 %v762
  %v827 = vcvt.s32.f32 %v763
  %v828 = vcvt.s32.f32 %v764
  %v829 = vcvt.s32.f32 %v765
  %v830 = vcvt.s32.f32 %v766
  %v831 = vcvt.s32.f32 %v767
  %v832 = vcvt.s32.f32 %v768
  %v833 = vcvt.s32.f32 %v769
  %v834 = vcvt.s32.f32 %v770
  %v835 = vcvt.s32.f32 %v771
  %v836 = vcvt.s32.f32 %v772
  %v837 = vcvt.s32.f32 %v773
  %v838 = vcvt.s32.f32 %v774
  %v839 = vcvt.s32.f32 %v775
  %v840 = vcvt.s32.f32 %v776
  %v841 = vcvt.s32.f32 %v777
  %v842 = vcvt.s32.f32 %v778
  %v843 = vcvt.s32.f32 %v779
  %v844 = vcvt.s32.f32 %v780
  %v845 = vcvt.s32.f32 %v781
  %v846 = vcvt.s32.f32 %v782
  %v847 = vcvt.s32.f32 %v783
  %v848 = vcvt.s32.f32 %v784
  %v849 = vcvt.s32.f32 %v785
  %v850 = vcvt.s32.f32 %v786
  %v851 = vcvt.s32.f32 %v787
  %v852 = vcvt.s32.f32 %v788
  %v853 = vcvt.s32.f32 %v789
  %v854 = vcvt.s32.f32 %v790
  %v855 = vcvt.s32.f32 %v791
  %v856 = vcvt.s32.f32 %v792
  %v857 = vcvt.s32.f32 %v793
  %v858 = vcvt.s32.f32 %v794
  %v859 = vcvt.s32.f32 %v795
  %v860 = vcvt.s32.f32 %v796
  %v861 = vcvt.s32.f32 %v797
  %v862 = vcvt.s32.f32 %v798
  %v863 = vcvt.s32.f32 %v799
  %v864 = vpack.c.bf16 %v804, %v800
  %v865 = vpack.c.bf16 %v805, %v801
  %v866 = vpack.c.bf16 %v806, %v802
  %v867 = vpack.c.bf16 %v807, %v803
  %v868 = vpack.c.bf16 %v812, %v808
  %v869 = vpack.c.bf16 %v813, %v809
  %v870 = vpack.c.bf16 %v814, %v810
  %v871 = vpack.c.bf16 %v815, %v811
  %v872 = vpack.c.bf16 %v820, %v816
  %v873 = vpack.c.bf16 %v821, %v817
  %v874 = vpack.c.bf16 %v822, %v818
  %v875 = vpack.c.bf16 %v823, %v819
  %v876 = vpack.c.bf16 %v828, %v824
  %v877 = vpack.c.bf16 %v829, %v825
  %v878 = vpack.c.bf16 %v830, %v826
  %v879 = vpack.c.bf16 %v831, %v827
  %v880 = vpack.c.bf16 %v836, %v832
  %v881 = vpack.c.bf16 %v837, %v833
  %v882 = vpack.c.bf16 %v838, %v834
  %v883 = vpack.c.bf16 %v839, %v835
  %v884 = vpack.c.bf16 %v844, %v840
  %v885 = vpack.c.bf16 %v845, %v841
  %v886 = vpack.c.bf16 %v846, %v842
  %v887 = vpack.c.bf16 %v847, %v843
  %v888 = vpack.c.bf16 %v852, %v848
  %v889 = vpack.c.bf16 %v853, %v849
  %v890 = vpack.c.bf16 %v854, %v850
  %v891 = vpack.c.bf16 %v855, %v851
  %v892 = vpack.c.bf16 %v860, %v856
  %v893 = vpack.c.bf16 %v861, %v857
  %v894 = vpack.c.bf16 %v862, %v858
  %v895 = vpack.c.bf16 %v863, %v859
  %v896 = vld [vmem:[%s1] sm:$0xf]
  %v897 = vld [vmem:[%s1 + $0x4] sm:$0xf]
  %v898 = vld [vmem:[%s1 + $0x8] sm:$0xf]
  %v899 = vld [vmem:[%s1 + $0xc] sm:$0xf]
  %v900 = vld [vmem:[%s1 + $0x10] sm:$0xf]
  %v901 = vld [vmem:[%s1 + $0x14] sm:$0xf]
  %v902 = vld [vmem:[%s1 + $0x18] sm:$0xf]
  %v903 = vld [vmem:[%s1 + $0x1c] sm:$0xf]
  %v904 = vld [vmem:[%s1 + $0x20] sm:$0xf]
  %v905 = vld [vmem:[%s1 + $0x24] sm:$0xf]
  %v906 = vld [vmem:[%s1 + $0x28] sm:$0xf]
  %v907 = vld [vmem:[%s1 + $0x2c] sm:$0xf]
  %v908 = vld [vmem:[%s1 + $0x30] sm:$0xf]
  %v909 = vld [vmem:[%s1 + $0x34] sm:$0xf]
  %v910 = vld [vmem:[%s1 + $0x38] sm:$0xf]
  %v911 = vld [vmem:[%s1 + $0x3c] sm:$0xf]
  %v912 = vld [vmem:[%s1 + $0x40] sm:$0xf]
  %v913 = vld [vmem:[%s1 + $0x44] sm:$0xf]
  %v914 = vld [vmem:[%s1 + $0x48] sm:$0xf]
  %v915 = vld [vmem:[%s1 + $0x4c] sm:$0xf]
  %v916 = vld [vmem:[%s1 + $0x50] sm:$0xf]
  %v917 = vld [vmem:[%s1 + $0x54] sm:$0xf]
  %v918 = vld [vmem:[%s1 + $0x58] sm:$0xf]
  %v919 = vld [vmem:[%s1 + $0x5c] sm:$0xf]
  %v920 = vld [vmem:[%s1 + $0x60] sm:$0xf]
  %v921 = vld [vmem:[%s1 + $0x64] sm:$0xf]
  %v922 = vld [vmem:[%s1 + $0x68] sm:$0xf]
  %v923 = vld [vmem:[%s1 + $0x6c] sm:$0xf]
  %v924 = vld [vmem:[%s1 + $0x70] sm:$0xf]
  %v925 = vld [vmem:[%s1 + $0x74] sm:$0xf]
  %v926 = vld [vmem:[%s1 + $0x78] sm:$0xf]
  %v927 = vld [vmem:[%s1 + $0x7c] sm:$0xf]
  %v928 = vld [vmem:[%s1 + $0x80] sm:$0xf]
  %v929 = vld [vmem:[%s1 + $0x84] sm:$0xf]
  %v930 = vld [vmem:[%s1 + $0x88] sm:$0xf]
  %v931 = vld [vmem:[%s1 + $0x8c] sm:$0xf]
  %v932 = vld [vmem:[%s1 + $0x90] sm:$0xf]
  %v933 = vld [vmem:[%s1 + $0x94] sm:$0xf]
  %v934 = vld [vmem:[%s1 + $0x98] sm:$0xf]
  %v935 = vld [vmem:[%s1 + $0x9c] sm:$0xf]
  %v936 = vld [vmem:[%s1 + $0xa0] sm:$0xf]
  %v937 = vld [vmem:[%s1 + $0xa4] sm:$0xf]
  %v938 = vld [vmem:[%s1 + $0xa8] sm:$0xf]
  %v939 = vld [vmem:[%s1 + $0xac] sm:$0xf]
  %v940 = vld [vmem:[%s1 + $0xb0] sm:$0xf]
  %v941 = vld [vmem:[%s1 + $0xb4] sm:$0xf]
  %v942 = vld [vmem:[%s1 + $0xb8] sm:$0xf]
  %v943 = vld [vmem:[%s1 + $0xbc] sm:$0xf]
  %v944 = vld [vmem:[%s1 + $0xc0] sm:$0xf]
  %v945 = vld [vmem:[%s1 + $0xc4] sm:$0xf]
  %v946 = vld [vmem:[%s1 + $0xc8] sm:$0xf]
  %v947 = vld [vmem:[%s1 + $0xcc] sm:$0xf]
  %v948 = vld [vmem:[%s1 + $0xd0] sm:$0xf]
  %v949 = vld [vmem:[%s1 + $0xd4] sm:$0xf]
  %v950 = vld [vmem:[%s1 + $0xd8] sm:$0xf]
  %v951 = vld [vmem:[%s1 + $0xdc] sm:$0xf]
  %v952 = vld [vmem:[%s1 + $0xe0] sm:$0xf]
  %v953 = vld [vmem:[%s1 + $0xe4] sm:$0xf]
  %v954 = vld [vmem:[%s1 + $0xe8] sm:$0xf]
  %v955 = vld [vmem:[%s1 + $0xec] sm:$0xf]
  %v956 = vld [vmem:[%s1 + $0xf0] sm:$0xf]
  %v957 = vld [vmem:[%s1 + $0xf4] sm:$0xf]
  %v958 = vld [vmem:[%s1 + $0xf8] sm:$0xf]
  %v959 = vld [vmem:[%s1 + $0xfc] sm:$0xf]
  %v960 = vld [vmem:[%s2] sm:$0x1]
  %v962 = vlaneseq
  %v963 = vshrl.u32 %v962, 7
  %v964 = vsub.s32 0, %v963
  %v965 = vrot.slane %v960, %v964
  %v1031 = vunpack.c.l.b16 %v896
  %v1032 = vunpack.c.l.b16 %v897
  %v1033 = vunpack.c.l.b16 %v898
  %v1034 = vunpack.c.l.b16 %v899
  %v1035 = vunpack.c.l.b16 %v900
  %v1036 = vunpack.c.l.b16 %v901
  %v1037 = vunpack.c.l.b16 %v902
  %v1038 = vunpack.c.l.b16 %v903
  %v1039 = vunpack.c.l.b16 %v904
  %v1040 = vunpack.c.l.b16 %v905
  %v1041 = vunpack.c.l.b16 %v906
  %v1042 = vunpack.c.l.b16 %v907
  %v1043 = vunpack.c.l.b16 %v908
  %v1044 = vunpack.c.l.b16 %v909
  %v1045 = vunpack.c.l.b16 %v910
  %v1046 = vunpack.c.l.b16 %v911
  %v1047 = vunpack.c.l.b16 %v912
  %v1048 = vunpack.c.l.b16 %v913
  %v1049 = vunpack.c.l.b16 %v914
  %v1050 = vunpack.c.l.b16 %v915
  %v1051 = vunpack.c.l.b16 %v916
  %v1052 = vunpack.c.l.b16 %v917
  %v1053 = vunpack.c.l.b16 %v918
  %v1054 = vunpack.c.l.b16 %v919
  %v1055 = vunpack.c.l.b16 %v920
  %v1056 = vunpack.c.l.b16 %v921
  %v1057 = vunpack.c.l.b16 %v922
  %v1058 = vunpack.c.l.b16 %v923
  %v1059 = vunpack.c.l.b16 %v924
  %v1060 = vunpack.c.l.b16 %v925
  %v1061 = vunpack.c.l.b16 %v926
  %v1062 = vunpack.c.l.b16 %v927
  %v1063 = vunpack.c.l.b16 %v928
  %v1064 = vunpack.c.l.b16 %v929
  %v1065 = vunpack.c.l.b16 %v930
  %v1066 = vunpack.c.l.b16 %v931
  %v1067 = vunpack.c.l.b16 %v932
  %v1068 = vunpack.c.l.b16 %v933
  %v1069 = vunpack.c.l.b16 %v934
  %v1070 = vunpack.c.l.b16 %v935
  %v1071 = vunpack.c.l.b16 %v936
  %v1072 = vunpack.c.l.b16 %v937
  %v1073 = vunpack.c.l.b16 %v938
  %v1074 = vunpack.c.l.b16 %v939
  %v1075 = vunpack.c.l.b16 %v940
  %v1076 = vunpack.c.l.b16 %v941
  %v1077 = vunpack.c.l.b16 %v942
  %v1078 = vunpack.c.l.b16 %v943
  %v1079 = vunpack.c.l.b16 %v944
  %v1080 = vunpack.c.l.b16 %v945
  %v1081 = vunpack.c.l.b16 %v946
  %v1082 = vunpack.c.l.b16 %v947
  %v1083 = vunpack.c.l.b16 %v948
  %v1084 = vunpack.c.l.b16 %v949
  %v1085 = vunpack.c.l.b16 %v950
  %v1086 = vunpack.c.l.b16 %v951
  %v1087 = vunpack.c.l.b16 %v952
  %v1088 = vunpack.c.l.b16 %v953
  %v1089 = vunpack.c.l.b16 %v954
  %v1090 = vunpack.c.l.b16 %v955
  %v1091 = vunpack.c.l.b16 %v956
  %v1092 = vunpack.c.l.b16 %v957
  %v1093 = vunpack.c.l.b16 %v958
  %v1094 = vunpack.c.l.b16 %v959
  %v1095 = vpack.c.b16 %v1032, %v1031
  %v1096 = vpack.c.b16 %v1034, %v1033
  %v1097 = vpack.c.b16 %v1036, %v1035
  %v1098 = vpack.c.b16 %v1038, %v1037
  %v1099 = vpack.c.b16 %v1040, %v1039
  %v1100 = vpack.c.b16 %v1042, %v1041
  %v1101 = vpack.c.b16 %v1044, %v1043
  %v1102 = vpack.c.b16 %v1046, %v1045
  %v1103 = vpack.c.b16 %v1048, %v1047
  %v1104 = vpack.c.b16 %v1050, %v1049
  %v1105 = vpack.c.b16 %v1052, %v1051
  %v1106 = vpack.c.b16 %v1054, %v1053
  %v1107 = vpack.c.b16 %v1056, %v1055
  %v1108 = vpack.c.b16 %v1058, %v1057
  %v1109 = vpack.c.b16 %v1060, %v1059
  %v1110 = vpack.c.b16 %v1062, %v1061
  %v1111 = vpack.c.b16 %v1064, %v1063
  %v1112 = vpack.c.b16 %v1066, %v1065
  %v1113 = vpack.c.b16 %v1068, %v1067
  %v1114 = vpack.c.b16 %v1070, %v1069
  %v1115 = vpack.c.b16 %v1072, %v1071
  %v1116 = vpack.c.b16 %v1074, %v1073
  %v1117 = vpack.c.b16 %v1076, %v1075
  %v1118 = vpack.c.b16 %v1078, %v1077
  %v1119 = vpack.c.b16 %v1080, %v1079
  %v1120 = vpack.c.b16 %v1082, %v1081
  %v1121 = vpack.c.b16 %v1084, %v1083
  %v1122 = vpack.c.b16 %v1086, %v1085
  %v1123 = vpack.c.b16 %v1088, %v1087
  %v1124 = vpack.c.b16 %v1090, %v1089
  %v1125 = vpack.c.b16 %v1092, %v1091
  %v1126 = vpack.c.b16 %v1094, %v1093
  %1159 = vmatprep.subr.bf16.mxu0 0
  %1160 = vmatpush1.bf16.msra.mxu0 %v1095
  %1161 = vmatprep.subr.bf16.mxu0 0
  %1162 = vmatpush1.bf16.msra.mxu0 %v1096
  %1163 = vmatprep.subr.bf16.mxu0 0
  %1164 = vmatpush1.bf16.msra.mxu0 %v1097
  %1165 = vmatprep.subr.bf16.mxu0 0
  %1166 = vmatpush1.bf16.msra.mxu0 %v1098
  %1167 = vmatprep.subr.bf16.mxu0 0
  %1168 = vmatpush1.bf16.msra.mxu0 %v1099
  %1169 = vmatprep.subr.bf16.mxu0 0
  %1170 = vmatpush1.bf16.msra.mxu0 %v1100
  %1171 = vmatprep.subr.bf16.mxu0 0
  %1172 = vmatpush1.bf16.msra.mxu0 %v1101
  %1173 = vmatprep.subr.bf16.mxu0 0
  %1174 = vmatpush1.bf16.msra.mxu0 %v1102
  %1175 = vmatprep.subr.bf16.mxu0 0
  %1176 = vmatpush1.bf16.msra.mxu0 %v1103
  %1177 = vmatprep.subr.bf16.mxu0 0
  %1178 = vmatpush1.bf16.msra.mxu0 %v1104
  %1179 = vmatprep.subr.bf16.mxu0 0
  %1180 = vmatpush1.bf16.msra.mxu0 %v1105
  %1181 = vmatprep.subr.bf16.mxu0 0
  %1182 = vmatpush1.bf16.msra.mxu0 %v1106
  %1183 = vmatprep.subr.bf16.mxu0 0
  %1184 = vmatpush1.bf16.msra.mxu0 %v1107
  %1185 = vmatprep.subr.bf16.mxu0 0
  %1186 = vmatpush1.bf16.msra.mxu0 %v1108
  %1187 = vmatprep.subr.bf16.mxu0 0
  %1188 = vmatpush1.bf16.msra.mxu0 %v1109
  %1189 = vmatprep.subr.bf16.mxu0 0
  %1190 = vmatpush1.bf16.msra.mxu0 %v1110
  %1191 = vmatprep.mubr.bf16.mxu0 %v865
  %1192 = vmatmul.mubr.bf16.gmra.mrb[0].mxu0 %v864
  %v1193 = vpop.f32.mrb[0].mxu0
  %v1194 = vadd.f32 %v965, %v1193
  %v1195 = vpop.f32.mrb[0].mxu0
  %v1196 = vpop.f32.mrb[0].mxu0
  %v1197 = vadd.f32 %v965, %v1196
  %v1198 = vpop.f32.mrb[0].mxu0
  %1199 = vmatprep.mubr.bf16.mxu0 %v869
  %1200 = vmatmul.mubr.bf16.gmra.mrb[0].mxu0 %v868
  %v1201 = vpop.f32.mrb[0].mxu0
  %v1202 = vadd.f32 %v965, %v1201
  %v1203 = vpop.f32.mrb[0].mxu0
  %v1204 = vpop.f32.mrb[0].mxu0
  %v1205 = vadd.f32 %v965, %v1204
  %v1206 = vpop.f32.mrb[0].mxu0
  %1207 = vmatprep.mubr.bf16.mxu0 %v873
  %1208 = vmatmul.mubr.bf16.gmra.mrb[0].mxu0 %v872
  %v1209 = vpop.f32.mrb[0].mxu0
  %v1210 = vadd.f32 %v965, %v1209
  %v1211 = vpop.f32.mrb[0].mxu0
  %v1212 = vpop.f32.mrb[0].mxu0
  %v1213 = vadd.f32 %v965, %v1212
  %v1214 = vpop.f32.mrb[0].mxu0
  %1215 = vmatprep.mubr.bf16.mxu0 %v877
  %1216 = vmatmul.mubr.bf16.gmra.mrb[0].mxu0 %v876
  %v1217 = vpop.f32.mrb[0].mxu0
  %v1218 = vadd.f32 %v965, %v1217
  %v1219 = vpop.f32.mrb[0].mxu0
  %v1220 = vpop.f32.mrb[0].mxu0
  %v1221 = vadd.f32 %v965, %v1220
  %v1222 = vpop.f32.mrb[0].mxu0
  %1223 = vmatprep.mubr.bf16.mxu0 %v881
  %1224 = vmatmul.mubr.bf16.gmra.mrb[0].mxu0 %v880
  %v1225 = vpop.f32.mrb[0].mxu0
  %v1226 = vadd.f32 %v965, %v1225
  %v1227 = vpop.f32.mrb[0].mxu0
  %v1228 = vpop.f32.mrb[0].mxu0
  %v1229 = vadd.f32 %v965, %v1228
  %v1230 = vpop.f32.mrb[0].mxu0
  %1231 = vmatprep.mubr.bf16.mxu0 %v885
  %1232 = vmatmul.mubr.bf16.gmra.mrb[0].mxu0 %v884
  %v1233 = vpop.f32.mrb[0].mxu0
  %v1234 = vadd.f32 %v965, %v1233
  %v1235 = vpop.f32.mrb[0].mxu0
  %v1236 = vpop.f32.mrb[0].mxu0
  %v1237 = vadd.f32 %v965, %v1236
  %v1238 = vpop.f32.mrb[0].mxu0
  %1239 = vmatprep.mubr.bf16.mxu0 %v889
  %1240 = vmatmul.mubr.bf16.gmra.mrb[0].mxu0 %v888
  %v1241 = vpop.f32.mrb[0].mxu0
  %v1242 = vadd.f32 %v965, %v1241
  %v1243 = vpop.f32.mrb[0].mxu0
  %v1244 = vpop.f32.mrb[0].mxu0
  %v1245 = vadd.f32 %v965, %v1244
  %v1246 = vpop.f32.mrb[0].mxu0
  %1247 = vmatprep.mubr.bf16.mxu0 %v893
  %1248 = vmatmul.mubr.bf16.gmra.mrb[0].mxu0 %v892
  %v1249 = vpop.f32.mrb[0].mxu0
  %v1250 = vadd.f32 %v965, %v1249
  %v1251 = vpop.f32.mrb[0].mxu0
  %v1252 = vpop.f32.mrb[0].mxu0
  %v1253 = vadd.f32 %v965, %v1252
  %v1254 = vpop.f32.mrb[0].mxu0
  %1255 = vdwg.mxu0
  %1256 = vmatprep.subr.bf16.mxu0 0
  %1257 = vmatpush1.bf16.msra.mxu0 %v1111
  %1258 = vmatprep.subr.bf16.mxu0 0
  %1259 = vmatpush1.bf16.msra.mxu0 %v1112
  %1260 = vmatprep.subr.bf16.mxu0 0
  %1261 = vmatpush1.bf16.msra.mxu0 %v1113
  %1262 = vmatprep.subr.bf16.mxu0 0
  %1263 = vmatpush1.bf16.msra.mxu0 %v1114
  %1264 = vmatprep.subr.bf16.mxu0 0
  %1265 = vmatpush1.bf16.msra.mxu0 %v1115
  %1266 = vmatprep.subr.bf16.mxu0 0
  %1267 = vmatpush1.bf16.msra.mxu0 %v1116
  %1268 = vmatprep.subr.bf16.mxu0 0
  %1269 = vmatpush1.bf16.msra.mxu0 %v1117
  %1270 = vmatprep.subr.bf16.mxu0 0
  %1271 = vmatpush1.bf16.msra.mxu0 %v1118
  %1272 = vmatprep.subr.bf16.mxu0 0
  %1273 = vmatpush1.bf16.msra.mxu0 %v1119
  %1274 = vmatprep.subr.bf16.mxu0 0
  %1275 = vmatpush1.bf16.msra.mxu0 %v1120
  %1276 = vmatprep.subr.bf16.mxu0 0
  %1277 = vmatpush1.bf16.msra.mxu0 %v1121
  %1278 = vmatprep.subr.bf16.mxu0 0
  %1279 = vmatpush1.bf16.msra.mxu0 %v1122
  %1280 = vmatprep.subr.bf16.mxu0 0
  %1281 = vmatpush1.bf16.msra.mxu0 %v1123
  %1282 = vmatprep.subr.bf16.mxu0 0
  %1283 = vmatpush1.bf16.msra.mxu0 %v1124
  %1284 = vmatprep.subr.bf16.mxu0 0
  %1285 = vmatpush1.bf16.msra.mxu0 %v1125
  %1286 = vmatprep.subr.bf16.mxu0 0
  %1287 = vmatpush1.bf16.msra.mxu0 %v1126
  %1288 = vmatprep.mubr.bf16.mxu0 %v867
  %1289 = vmatmul.mubr.bf16.gmra.mrb[0].mxu0 %v866
  %v1290 = vpop.f32.mrb[0].mxu0
  %v1291 = vadd.f32 %v1194, %v1290
  %v1292 = vpop.f32.mrb[0].mxu0
  %v1293 = vpop.f32.mrb[0].mxu0
  %v1294 = vadd.f32 %v1197, %v1293
  %v1295 = vpop.f32.mrb[0].mxu0
  %1296 = vmatprep.mubr.bf16.mxu0 %v871
  %1297 = vmatmul.mubr.bf16.gmra.mrb[0].mxu0 %v870
  %v1298 = vpop.f32.mrb[0].mxu0
  %v1299 = vadd.f32 %v1202, %v1298
  %v1300 = vpop.f32.mrb[0].mxu0
  %v1301 = vpop.f32.mrb[0].mxu0
  %v1302 = vadd.f32 %v1205, %v1301
  %v1303 = vpop.f32.mrb[0].mxu0
  %1304 = vmatprep.mubr.bf16.mxu0 %v875
  %1305 = vmatmul.mubr.bf16.gmra.mrb[0].mxu0 %v874
  %v1306 = vpop.f32.mrb[0].mxu0
  %v1307 = vadd.f32 %v1210, %v1306
  %v1308 = vpop.f32.mrb[0].mxu0
  %v1309 = vpop.f32.mrb[0].mxu0
  %v1310 = vadd.f32 %v1213, %v1309
  %v1311 = vpop.f32.mrb[0].mxu0
  %1312 = vmatprep.mubr.bf16.mxu0 %v879
  %1313 = vmatmul.mubr.bf16.gmra.mrb[0].mxu0 %v878
  %v1314 = vpop.f32.mrb[0].mxu0
  %v1315 = vadd.f32 %v1218, %v1314
  %v1316 = vpop.f32.mrb[0].mxu0
  %v1317 = vpop.f32.mrb[0].mxu0
  %v1318 = vadd.f32 %v1221, %v1317
  %v1319 = vpop.f32.mrb[0].mxu0
  %1320 = vmatprep.mubr.bf16.mxu0 %v883
  %1321 = vmatmul.mubr.bf16.gmra.mrb[0].mxu0 %v882
  %v1322 = vpop.f32.mrb[0].mxu0
  %v1323 = vadd.f32 %v1226, %v1322
  %v1324 = vpop.f32.mrb[0].mxu0
  %v1325 = vpop.f32.mrb[0].mxu0
  %v1326 = vadd.f32 %v1229, %v1325
  %v1327 = vpop.f32.mrb[0].mxu0
  %1328 = vmatprep.mubr.bf16.mxu0 %v887
  %1329 = vmatmul.mubr.bf16.gmra.mrb[0].mxu0 %v886
  %v1330 = vpop.f32.mrb[0].mxu0
  %v1331 = vadd.f32 %v1234, %v1330
  %v1332 = vpop.f32.mrb[0].mxu0
  %v1333 = vpop.f32.mrb[0].mxu0
  %v1334 = vadd.f32 %v1237, %v1333
  %v1335 = vpop.f32.mrb[0].mxu0
  %1336 = vmatprep.mubr.bf16.mxu0 %v891
  %1337 = vmatmul.mubr.bf16.gmra.mrb[0].mxu0 %v890
  %v1338 = vpop.f32.mrb[0].mxu0
  %v1339 = vadd.f32 %v1242, %v1338
  %v1340 = vpop.f32.mrb[0].mxu0
  %v1341 = vpop.f32.mrb[0].mxu0
  %v1342 = vadd.f32 %v1245, %v1341
  %v1343 = vpop.f32.mrb[0].mxu0
  %1344 = vmatprep.mubr.bf16.mxu0 %v895
  %1345 = vmatmul.mubr.bf16.gmra.mrb[0].mxu0 %v894
  %v1346 = vpop.f32.mrb[0].mxu0
  %v1347 = vadd.f32 %v1250, %v1346
  %v1348 = vpop.f32.mrb[0].mxu0
  %v1349 = vpop.f32.mrb[0].mxu0
  %v1350 = vadd.f32 %v1253, %v1349
  %v1351 = vpop.f32.mrb[0].mxu0
  %1352 = vdwg.mxu0
  %v1353 = vmax.f32 %v1291, 0.0
  %v1354 = vmax.f32 %v1294, 0.0
  %v1355 = vmax.f32 %v1299, 0.0
  %v1356 = vmax.f32 %v1302, 0.0
  %v1357 = vmax.f32 %v1307, 0.0
  %v1358 = vmax.f32 %v1310, 0.0
  %v1359 = vmax.f32 %v1315, 0.0
  %v1360 = vmax.f32 %v1318, 0.0
  %v1361 = vmax.f32 %v1323, 0.0
  %v1362 = vmax.f32 %v1326, 0.0
  %v1363 = vmax.f32 %v1331, 0.0
  %v1364 = vmax.f32 %v1334, 0.0
  %v1365 = vmax.f32 %v1339, 0.0
  %v1366 = vmax.f32 %v1342, 0.0
  %v1367 = vmax.f32 %v1347, 0.0
  %v1368 = vmax.f32 %v1350, 0.0
  %v1369 = vld [vmem:[%s3] sm:$0xff]
  %v1370 = vld [vmem:[%s3 + $0x8] sm:$0xff]
  %v1371 = vmul.f32 %v1353, %v1369
  %v1372 = vmul.f32 %v1354, %v1370
  %v1373 = vmul.f32 %v1355, %v1369
  %v1374 = vmul.f32 %v1356, %v1370
  %v1375 = vmul.f32 %v1357, %v1369
  %v1376 = vmul.f32 %v1358, %v1370
  %v1377 = vmul.f32 %v1359, %v1369
  %v1378 = vmul.f32 %v1360, %v1370
  %v1379 = vmul.f32 %v1361, %v1369
  %v1380 = vmul.f32 %v1362, %v1370
  %v1381 = vmul.f32 %v1363, %v1369
  %v1382 = vmul.f32 %v1364, %v1370
  %v1383 = vmul.f32 %v1365, %v1369
  %v1384 = vmul.f32 %v1366, %v1370
  %v1385 = vmul.f32 %v1367, %v1369
  %v1386 = vmul.f32 %v1368, %v1370
  %v1387 = vmax.f32 %v1371, %v1372
  %v1388 = vrot.slane %v1387, 4
  %v1389 = vmax.f32 %v1387, %v1388
  %v1390 = vrot.slane %v1389, 2
  %v1391 = vmax.f32 %v1389, %v1390
  %v1392 = vrot.slane %v1391, 1
  %v1393 = vmax.f32 %v1391, %v1392
  %v1394 = vmax.f32 %v1373, %v1374
  %v1395 = vrot.slane %v1394, 4
  %v1396 = vmax.f32 %v1394, %v1395
  %v1397 = vrot.slane %v1396, 2
  %v1398 = vmax.f32 %v1396, %v1397
  %v1399 = vrot.slane %v1398, 1
  %v1400 = vmax.f32 %v1398, %v1399
  %v1401 = vmax.f32 %v1375, %v1376
  %v1402 = vrot.slane %v1401, 4
  %v1403 = vmax.f32 %v1401, %v1402
  %v1404 = vrot.slane %v1403, 2
  %v1405 = vmax.f32 %v1403, %v1404
  %v1406 = vrot.slane %v1405, 1
  %v1407 = vmax.f32 %v1405, %v1406
  %v1408 = vmax.f32 %v1377, %v1378
  %v1409 = vrot.slane %v1408, 4
  %v1410 = vmax.f32 %v1408, %v1409
  %v1411 = vrot.slane %v1410, 2
  %v1412 = vmax.f32 %v1410, %v1411
  %v1413 = vrot.slane %v1412, 1
  %v1414 = vmax.f32 %v1412, %v1413
  %v1415 = vmax.f32 %v1379, %v1380
  %v1416 = vrot.slane %v1415, 4
  %v1417 = vmax.f32 %v1415, %v1416
  %v1418 = vrot.slane %v1417, 2
  %v1419 = vmax.f32 %v1417, %v1418
  %v1420 = vrot.slane %v1419, 1
  %v1421 = vmax.f32 %v1419, %v1420
  %v1422 = vmax.f32 %v1381, %v1382
  %v1423 = vrot.slane %v1422, 4
  %v1424 = vmax.f32 %v1422, %v1423
  %v1425 = vrot.slane %v1424, 2
  %v1426 = vmax.f32 %v1424, %v1425
  %v1427 = vrot.slane %v1426, 1
  %v1428 = vmax.f32 %v1426, %v1427
  %v1429 = vmax.f32 %v1383, %v1384
  %v1430 = vrot.slane %v1429, 4
  %v1431 = vmax.f32 %v1429, %v1430
  %v1432 = vrot.slane %v1431, 2
  %v1433 = vmax.f32 %v1431, %v1432
  %v1434 = vrot.slane %v1433, 1
  %v1435 = vmax.f32 %v1433, %v1434
  %v1436 = vmax.f32 %v1385, %v1386
  %v1437 = vrot.slane %v1436, 4
  %v1438 = vmax.f32 %v1436, %v1437
  %v1439 = vrot.slane %v1438, 2
  %v1440 = vmax.f32 %v1438, %v1439
  %v1441 = vrot.slane %v1440, 1
  %v1442 = vmax.f32 %v1440, %v1441
  %v1443 = vpack.c.bf16 %v1393, %v1393
  %v1444 = vpack.c.bf16 %v1400, %v1400
  %v1445 = vpack.c.bf16 %v1407, %v1407
  %v1446 = vpack.c.bf16 %v1414, %v1414
  %v1447 = vpack.c.bf16 %v1421, %v1421
  %v1448 = vpack.c.bf16 %v1428, %v1428
  %v1449 = vpack.c.bf16 %v1435, %v1435
  %v1450 = vpack.c.bf16 %v1442, %v1442
  %v1451 = vld [vmem:[%s4] sm:$0xf]
  %v1452 = vld [vmem:[%s4 + $0x4] sm:$0xf]
  %v1453 = vld [vmem:[%s4 + $0x8] sm:$0xf]
  %v1454 = vld [vmem:[%s4 + $0xc] sm:$0xf]
  %v1455 = vld [vmem:[%s4 + $0x10] sm:$0xf]
  %v1456 = vld [vmem:[%s4 + $0x14] sm:$0xf]
  %v1457 = vld [vmem:[%s4 + $0x18] sm:$0xf]
  %v1458 = vld [vmem:[%s4 + $0x1c] sm:$0xf]
  %v1459 = vld [vmem:[%s4 + $0x20] sm:$0xf]
  %v1460 = vld [vmem:[%s4 + $0x24] sm:$0xf]
  %v1461 = vld [vmem:[%s4 + $0x28] sm:$0xf]
  %v1462 = vld [vmem:[%s4 + $0x2c] sm:$0xf]
  %v1463 = vld [vmem:[%s4 + $0x30] sm:$0xf]
  %v1464 = vld [vmem:[%s4 + $0x34] sm:$0xf]
  %v1465 = vld [vmem:[%s4 + $0x38] sm:$0xf]
  %v1466 = vld [vmem:[%s4 + $0x3c] sm:$0xf]
  %v1467 = vld [vmem:[%s5] sm:$0x1]
  %v1469 = vlaneseq
  %v1470 = vshrl.u32 %v1469, 7
  %v1471 = vsub.s32 0, %v1470
  %v1472 = vrot.slane %v1467, %v1471
  %v1482 = vunpack.c.l.b16 %v1443
  %v1483 = vunpack.c.l.b16 %v1444
  %v1484 = vunpack.c.l.b16 %v1445
  %v1485 = vunpack.c.l.b16 %v1446
  %v1486 = vunpack.c.l.b16 %v1447
  %v1487 = vunpack.c.l.b16 %v1448
  %v1488 = vunpack.c.l.b16 %v1449
  %v1489 = vunpack.c.l.b16 %v1450
  %vm1490 = vcmask 1041409
  %v1491 = vsel %vm1490, %v1483, %v1482
  %vm1492 = vcmask 1042434
  %v1493 = vsel %vm1492, %v1484, %v1491
  %vm1494 = vcmask 1043459
  %v1495 = vsel %vm1494, %v1485, %v1493
  %vm1496 = vcmask 1044484
  %v1497 = vsel %vm1496, %v1486, %v1495
  %vm1498 = vcmask 1045509
  %v1499 = vsel %vm1498, %v1487, %v1497
  %vm1500 = vcmask 1046534
  %v1501 = vsel %vm1500, %v1488, %v1499
  %vm1502 = vcmask 1047559
  %v1503 = vsel %vm1502, %v1489, %v1501
  %v1504 = vpack.c.b16 %v1503, %v1503
  %v1522 = vunpack.c.l.b16 %v1451
  %v1523 = vunpack.c.l.b16 %v1452
  %v1524 = vunpack.c.l.b16 %v1453
  %v1525 = vunpack.c.l.b16 %v1454
  %v1526 = vunpack.c.l.b16 %v1455
  %v1527 = vunpack.c.l.b16 %v1456
  %v1528 = vunpack.c.l.b16 %v1457
  %v1529 = vunpack.c.l.b16 %v1458
  %v1530 = vunpack.c.l.b16 %v1459
  %v1531 = vunpack.c.l.b16 %v1460
  %v1532 = vunpack.c.l.b16 %v1461
  %v1533 = vunpack.c.l.b16 %v1462
  %v1534 = vunpack.c.l.b16 %v1463
  %v1535 = vunpack.c.l.b16 %v1464
  %v1536 = vunpack.c.l.b16 %v1465
  %v1537 = vunpack.c.l.b16 %v1466
  %v1538 = vpack.c.b16 %v1523, %v1522
  %v1539 = vpack.c.b16 %v1525, %v1524
  %v1540 = vpack.c.b16 %v1527, %v1526
  %v1541 = vpack.c.b16 %v1529, %v1528
  %v1542 = vpack.c.b16 %v1531, %v1530
  %v1543 = vpack.c.b16 %v1533, %v1532
  %v1544 = vpack.c.b16 %v1535, %v1534
  %v1545 = vpack.c.b16 %v1537, %v1536
  %1554 = vmatprep.subr.bf16.mxu0 0
  %1555 = vmatpush1.bf16.msra.mxu0 %v1538
  %1556 = vmatprep.subr.bf16.mxu0 0
  %1557 = vmatpush1.bf16.msra.mxu0 %v1539
  %1558 = vmatprep.subr.bf16.mxu0 0
  %1559 = vmatpush1.bf16.msra.mxu0 %v1540
  %1560 = vmatprep.subr.bf16.mxu0 0
  %1561 = vmatpush1.bf16.msra.mxu0 %v1541
  %1562 = vmatprep.subr.bf16.mxu0 0
  %1563 = vmatpush1.bf16.msra.mxu0 %v1542
  %1564 = vmatprep.subr.bf16.mxu0 0
  %1565 = vmatpush1.bf16.msra.mxu0 %v1543
  %1566 = vmatprep.subr.bf16.mxu0 0
  %1567 = vmatpush1.bf16.msra.mxu0 %v1544
  %1568 = vmatprep.subr.bf16.mxu0 0
  %1569 = vmatpush1.bf16.msra.mxu0 %v1545
  %1570 = vmatprep.subr.bf16.mxu0 0
  %1571 = vmatpush1.bf16.msra.mxu0 0
  %1572 = vmatprep.subr.bf16.mxu0 0
  %1573 = vmatpush1.bf16.msra.mxu0 0
  %1574 = vmatprep.subr.bf16.mxu0 0
  %1575 = vmatpush1.bf16.msra.mxu0 0
  %1576 = vmatprep.subr.bf16.mxu0 0
  %1577 = vmatpush1.bf16.msra.mxu0 0
  %1578 = vmatprep.subr.bf16.mxu0 0
  %1579 = vmatpush1.bf16.msra.mxu0 0
  %1580 = vmatprep.subr.bf16.mxu0 0
  %1581 = vmatpush1.bf16.msra.mxu0 0
  %1582 = vmatprep.subr.bf16.mxu0 0
  %1583 = vmatpush1.bf16.msra.mxu0 0
  %1584 = vmatprep.subr.bf16.mxu0 0
  %1585 = vmatpush1.bf16.msra.mxu0 0
  %1586 = vmatprep.mubr.bf16.mxu0 0
  %1587 = vmatmul.mubr.bf16.gmra.mrb[0].mxu0 %v1504
  %v1588 = vpop.f32.mrb[0].mxu0
  %v1589 = vadd.f32 %v1472, %v1588
  %v1590 = vpop.f32.mrb[0].mxu0
  %v1591 = vpop.f32.mrb[0].mxu0
  %v1592 = vpop.f32.mrb[0].mxu0
  %1593 = vdwg.mxu0
  %1594 = vst [vmem:[%s6] sm:$0xff] %v1589
  // Predicated region
  $region26: #{textcnn_forward.1} parent=0 // pred_check
    _
  $region27: #{textcnn_forward.1} parent=0 // pred_check_branch
    %1596 = sbr.rel (0) target = $region29
  $region28: #{textcnn_forward.1} parent=0 // pred_region
    _
  $region29: #{textcnn_forward.1} parent=0 // pred_fallthru
    _
  // Predicated region
  $region30: #{textcnn_forward.1} parent=0 // pred_check
    _
  $region31: #{textcnn_forward.1} parent=0 // pred_check_branch
    %1598 = sbr.rel (0) target = $region33
  $region32: #{textcnn_forward.1} parent=0 // pred_region
    _
  $region33: #{textcnn_forward.1} parent=0 // pred_fallthru
    _

</llo_original>
